<compile_context>
chip_gen: v6e
topology: v6e:2x2x1
jax: 0.10.0
libtpu: 0.0.40
codegen_flags: <defaults>
</compile_context>

<pallas_src>
from collections import namedtuple

import jax
import jax.numpy as jnp
from jax.experimental import pallas as pl
from jax.experimental.pallas import tpu as pltpu


Dims = namedtuple(
    "Dims",
    ["C0", "C1", "C2", "C3", "KP1", "K2", "K3", "s1", "s2", "s3",
     "L0", "L1", "L2", "L3", "R", "N1", "N2", "LP", "B1", "B2", "B3"],
)

PAD = 8          # sublane-pad tail rows for the batched slices
LANES = 128      # lane width of the packed parameter slab


# ----------------------------------------------------------------------------
# One-time host-side parameter preprocessing (pure layout work, no math change)
# ----------------------------------------------------------------------------
def prepare_params(raw_params, strides, in_len):
    (w1, b1), (w2, b2), (w3, b3), (lw1, lb1), (lw2, lb2) = raw_params
    s1, s2, s3 = strides
    f32 = jnp.float32

    C1, C0, K1 = w1.shape
    C2, _, K2 = w2.shape
    C3, _, K3 = w3.shape
    L0 = in_len
    L1 = (L0 - K1) // s1 + 1
    L2 = (L1 - K2) // s2 + 1
    L3 = (L2 - K3) // s3 + 1
    N1, f = lw1.shape
    N2 = lw2.shape[0]
    assert (C3 * L3) % f == 0, "torch view(-1, f) must tile evenly per batch element"
    R = (C3 * L3) // f                     # flattened rows per batch element

    # ---- padded per-batch block sizes for sublane batch folding -------------
    assert s1 == 2 and L0 % 2 == 0, "conv1 lane stride-folding assumes stride 2"
    KP1 = (K1 + 1) // 2                    # conv1 taps after pair-folding
    LP = L0 // s1                          # packed (pair) rows per batch element
    B1 = LP                                # conv1 output block rows per batch
    assert L1 <= B1 and (L1 - 1) + (KP1 - 1) <= LP - 1      # valid rows stay in-batch
    assert B1 % s2 == 0
    B2 = B1 // s2
    assert L2 <= B2 and s2 * (L2 - 1) + K2 - 1 <= B1 - 1    # never read conv1 garbage
    assert B2 % s3 == 0
    B3 = B2 // s3
    assert L3 <= B3 and s3 * (L3 - 1) + K3 - 1 <= B2 - 1    # never read conv2 garbage

    # ---- conv weights -> per-tap channels-last (Cin, Cout) slabs ------------
    w1_pairs = []
    for p in range(KP1):                   # pair taps (even, odd); pad odd tail tap
        wa = w1[:, :, 2 * p].T                                        # (C0, C1)
        wb = w1[:, :, 2 * p + 1].T if 2 * p + 1 < K1 else jnp.zeros_like(w1[:, :, 0].T)
        w1_pairs.append(jnp.concatenate([wa, wb], axis=0))            # (2*C0, C1)
    w1p = jnp.concatenate(w1_pairs, axis=0).astype(f32)               # (KP1*2*C0, C1)
    w2t = jnp.transpose(w2, (2, 1, 0)).reshape(K2 * C1, C2).astype(f32)
    w3t = jnp.transpose(w3, (2, 1, 0)).reshape(K3 * C2, C3).astype(f32)

    # ---- flatten + lin1 fold: block-diagonal lw1, rows reordered to (l, c) --
    wbig = jnp.kron(jnp.eye(R, dtype=f32), lw1.T.astype(f32))         # (C3*L3, R*N1)
    wl1 = wbig.reshape(C3, L3, R * N1).transpose(1, 0, 2).reshape(L3 * C3, R * N1)
    bl1 = jnp.tile(lb1.astype(f32), R).reshape(1, R * N1)
    wl2 = jnp.kron(jnp.eye(R, dtype=f32), lw2.T.astype(f32))          # (R*N1, R*N2)
    bl2 = jnp.tile(lb2.astype(f32), R).reshape(1, R * N2)

    # ---- pack everything into one 128-lane parameter slab -------------------
    blocks = {
        "w1": w1p, "b1": b1.reshape(1, C1).astype(f32),
        "w2": w2t, "b2": b2.reshape(1, C2).astype(f32),
        "w3": w3t, "b3": b3.reshape(1, C3).astype(f32),
        "wl1": wl1, "bl1": bl1,
        "wl2": wl2, "bl2": bl2,
    }
    off, cur = {}, 0
    for name, arr in blocks.items():
        assert arr.shape[1] <= LANES
        off[name] = cur
        cur += -(-arr.shape[0] // 8) * 8             # 8-sublane aligned sub-blocks
    slab = jnp.zeros((cur, LANES), f32)
    for name, arr in blocks.items():
        slab = slab.at[off[name]:off[name] + arr.shape[0], :arr.shape[1]].set(arr)

    dims = Dims(C0, C1, C2, C3, KP1, K2, K3, s1, s2, s3,
                L0, L1, L2, L3, R, N1, N2, LP, B1, B2, B3)
    return slab, dims, off


# ----------------------------------------------------------------------------
# Fused forward pass: one Pallas kernel for the whole network.
# ----------------------------------------------------------------------------
def make_cnn7_forward(dims, off, batch_size):
    d = dims
    B = batch_size
    XROWS = B * d.LP + PAD
    A1ROWS = B * d.B1 + PAD
    A2ROWS = B * d.B2 + PAD

    def kernel(x_ref, p_ref, o_ref, a1, a2, a3, yf):
        f32 = jnp.float32

        # Zero the scratch tail pads once; they are only ever read by the
        # padded garbage rows of the last batch block (kept finite & in-bounds).
        a1[pl.ds(B * d.B1, PAD), :] = jnp.zeros((PAD, d.C1), f32)
        a2[pl.ds(B * d.B2, PAD), :] = jnp.zeros((PAD, d.C2), f32)

        # ---- conv1 + ReLU : (B*LP, 2*C0) -> (B*B1, C1), unit-stride taps ----
        def w1tap(t):
            return p_ref[pl.ds(off["w1"] + t * 2 * d.C0, 2 * d.C0), pl.ds(0, d.C1)]
        acc = (jnp.dot(x_ref[pl.ds(0, B * d.B1), :], w1tap(0),
                       preferred_element_type=f32)
               + p_ref[pl.ds(off["b1"], 1), pl.ds(0, d.C1)])
        for t in range(1, d.KP1):
            acc += jnp.dot(x_ref[pl.ds(t, B * d.B1), :], w1tap(t),
                           preferred_element_type=f32)
        a1[pl.ds(0, B * d.B1), :] = jnp.maximum(acc, 0.0)

        # ---- conv2 + ReLU : (B*B1, C1) -> (B*B2, C2), stride-s2 taps --------
        def w2tap(t):
            return p_ref[pl.ds(off["w2"] + t * d.C1, d.C1), pl.ds(0, d.C2)]
        acc = (jnp.dot(a1[pl.ds(0, B * d.B2, stride=d.s2), :], w2tap(0),
                       preferred_element_type=f32)
               + p_ref[pl.ds(off["b2"], 1), pl.ds(0, d.C2)])
        for t in range(1, d.K2):
            acc += jnp.dot(a1[pl.ds(t, B * d.B2, stride=d.s2), :], w2tap(t),
                           preferred_element_type=f32)
        a2[pl.ds(0, B * d.B2), :] = jnp.maximum(acc, 0.0)

        # ---- conv3 + ReLU : (B*B2, C2) -> (B*B3, C3) ------------------------
        def w3tap(t):
            return p_ref[pl.ds(off["w3"] + t * d.C2, d.C2), pl.ds(0, d.C3)]
        acc = (jnp.dot(a2[pl.ds(0, B * d.B3, stride=d.s3), :], w3tap(0),
                       preferred_element_type=f32)
               + p_ref[pl.ds(off["b3"], 1), pl.ds(0, d.C3)])
        for t in range(1, d.K3):
            acc += jnp.dot(a2[pl.ds(t, B * d.B3, stride=d.s3), :], w3tap(t),
                           preferred_element_type=f32)
        a3[...] = jnp.maximum(acc, 0.0)

        # ---- torch view(-1, f) + lin1 + ReLU: lane-pack a3, ONE matmul ------
        for l in range(d.L3):
            yf[:, pl.ds(l * d.C3, d.C3)] = a3[pl.ds(l, B, stride=d.B3), :]
        y = jnp.dot(yf[...],
                    p_ref[pl.ds(off["wl1"], d.L3 * d.C3), pl.ds(0, d.R * d.N1)],
                    preferred_element_type=f32)
        y = jnp.maximum(y + p_ref[pl.ds(off["bl1"], 1), pl.ds(0, d.R * d.N1)], 0.0)

        # ---- lin2 + final ReLU, single dense store --------------------------
        o = jnp.dot(y, p_ref[pl.ds(off["wl2"], d.R * d.N1), pl.ds(0, d.R * d.N2)],
                    preferred_element_type=f32)
        o = o + p_ref[pl.ds(off["bl2"], 1), pl.ds(0, d.R * d.N2)]
        o_ref[...] = jnp.maximum(o, 0.0)

    vmem = pltpu.MemorySpace.VMEM
    call = pl.pallas_call(
        kernel,
        out_shape=jax.ShapeDtypeStruct((B, d.R * d.N2), jnp.float32),
        in_specs=[pl.BlockSpec(memory_space=vmem),
                  pl.BlockSpec(memory_space=vmem)],
        out_specs=pl.BlockSpec(memory_space=vmem),
        scratch_shapes=[
            pltpu.VMEM((A1ROWS, d.C1), jnp.float32),        # conv1 activations
            pltpu.VMEM((A2ROWS, d.C2), jnp.float32),        # conv2 activations
            pltpu.VMEM((B * d.B3, d.C3), jnp.float32),      # conv3 activations
            pltpu.VMEM((B, d.L3 * d.C3), jnp.float32),      # lane-packed flatten
        ],
    )

    @jax.jit
    def forward(slab, x):
        assert x.shape == (B, d.C0, d.L0)
        # Channels-last with conv1's stride-2 folded into lanes:
        # row b*LP + p holds [x[b,:,2p], x[b,:,2p+1]]; zero tail pad rows.
        xp = jnp.transpose(x, (0, 2, 1)).astype(jnp.float32)
        xp = xp.reshape(B * d.LP, 2 * d.C0)
        xp = jnp.pad(xp, ((0, XROWS - B * d.LP), (0, 0)))
        out = call(xp, slab)
        # (B, R*N2) -> (B*R, N2): identical row order to torch's x.view(-1, f).
        return out.reshape(B * d.R, d.N2)

    return forward


# ----------------------------------------------------------------------------
# Deterministic parameter init (PyTorch-style uniform fan-in bounds).
# ----------------------------------------------------------------------------
def _init_conv(key, cout, cin, k):
    kw, kb = jax.random.split(key)
    bound = 1.0 / jnp.sqrt(cin * k)
    w = jax.random.uniform(kw, (cout, cin, k), jnp.float32, -bound, bound)
    b = jax.random.uniform(kb, (cout,), jnp.float32, -bound, bound)
    return w, b


def _init_linear(key, nout, nin):
    kw, kb = jax.random.split(key)
    bound = 1.0 / jnp.sqrt(nin)
    w = jax.random.uniform(kw, (nout, nin), jnp.float32, -bound, bound)
    b = jax.random.uniform(kb, (nout,), jnp.float32, -bound, bound)
    return w, b


# ----------------------------------------------------------------------------
# Pure-JAX (non-Pallas) replica of CNN_7.forward for validation.
# ----------------------------------------------------------------------------
def _reference_forward(raw_params, strides, x):
    (w1, b1), (w2, b2), (w3, b3), (lw1, lb1), (lw2, lb2) = raw_params

    def conv1d(a, w, bias, s):
        _, _, L = a.shape
        _, _, K = w.shape
        Lout = (L - K) // s + 1
        idx = jnp.arange(Lout)[:, None] * s + jnp.arange(K)[None, :]
        patches = a[:, :, idx]                               # (B, Cin, Lout, K)
        return jnp.einsum("bclk,ock->bol", patches, w) + bias[None, :, None]

    a = jax.nn.relu(conv1d(x, w1, b1, strides[0]))
    a = jax.nn.relu(conv1d(a, w2, b2, strides[1]))
    a = jax.nn.relu(conv1d(a, w3, b3, strides[2]))
    a = a.reshape(-1, w3.shape[0])                           # torch x.view(-1, f)
    a = jax.nn.relu(a @ lw1.T + lb1)
    a = jax.nn.relu(a @ lw2.T + lb2)
    return a


if __name__ == "__main__":
    # cfg: batch_size=2, n_inputs=4, cnn K = [(win=64, f=8), (5, 2), (3, 2), (3, 2), 16]
    B, C, WIN = 2, 4, 64
    F1, N_HID = 8, 16
    k1, k2, k3 = (5, 2), (3, 2), (3, 2)

    key = jax.random.PRNGKey(0)
    kx, kc1, kc2, kc3, kl1, kl2 = jax.random.split(key, 6)

    x = jax.random.normal(kx, (B, C, WIN), jnp.float32)

    raw_params = (
        _init_conv(kc1, F1, C, k1[0]),            # conv1: (8, 4, 5)
        _init_conv(kc2, 2 * F1, F1, k2[0]),       # conv2: (16, 8, 3)
        _init_conv(kc3, 4 * F1, 2 * F1, k3[0]),   # conv3: (32, 16, 3)
        _init_linear(kl1, N_HID, 4 * F1),         # lin1: (16, 32)
        _init_linear(kl2, 1, N_HID),              # lin2: (1, 16)
    )
    strides = (k1[1], k2[1], k3[1])

    slab, dims, off = prepare_params(raw_params, strides, WIN)
    forward = make_cnn7_forward(dims, off, B)

    out = jax.block_until_ready(forward(slab, x))

    # L1=30, L2=14, L3=6 -> flattened rows = B * 6 = 12, final shape (12, 1)
    assert out.shape == (12, 1), out.shape
    assert out.dtype == jnp.float32

    ref = _reference_forward(raw_params, strides, x)
    max_err = float(jnp.max(jnp.abs(out - ref)))
    assert jnp.allclose(out, ref, atol=2e-3, rtol=2e-3), f"max |err| = {max_err}"
    print("KERNEL_OK")
</pallas_src>

<mosaic_0001>
module attributes {stable_mosaic.version = 11 : i64} {
  func.func @kernel(%arg0: memref<72x8xf32, #tpu.memory_space<vmem>>, %arg1: memref<424x128xf32, #tpu.memory_space<vmem>>, %arg2: memref<2x6xf32, #tpu.memory_space<vmem>>, %arg3: memref<72x8xf32, #tpu.memory_space<vmem>>, %arg4: memref<40x16xf32, #tpu.memory_space<vmem>>, %arg5: memref<16x32xf32, #tpu.memory_space<vmem>>, %arg6: memref<2x192xf32, #tpu.memory_space<vmem>>) attributes {dimension_semantics = [], scalar_prefetch = 0 : i64, scratch_operands = 4 : i64, tpu.core_type = #tpu.core_type<tc>} {
    %cst = arith.constant 0.000000e+00 : f32
    %0 = vector.broadcast %cst : f32 to vector<8x8xf32>
    %c64 = arith.constant 64 : index
    %c0 = arith.constant 0 : index
    %1 = vector.load %arg3[%c64, %c0] : memref<72x8xf32, #tpu.memory_space<vmem>>, vector<8x8xf32>
    tpu.vector_store %arg3[%c64, %c0], %0 {strides = array<i32>} : memref<72x8xf32, #tpu.memory_space<vmem>>, vector<8x8xf32>,
    %cst_0 = arith.constant 0.000000e+00 : f32
    %2 = vector.broadcast %cst_0 : f32 to vector<8x16xf32>
    %c32 = arith.constant 32 : index
    %c0_1 = arith.constant 0 : index
    %3 = vector.load %arg4[%c32, %c0_1] : memref<40x16xf32, #tpu.memory_space<vmem>>, vector<8x16xf32>
    tpu.vector_store %arg4[%c32, %c0_1], %2 {strides = array<i32>} : memref<40x16xf32, #tpu.memory_space<vmem>>, vector<8x16xf32>,
    %c0_2 = arith.constant 0 : index
    %c0_3 = arith.constant 0 : index
    %4 = vector.load %arg0[%c0_2, %c0_3] : memref<72x8xf32, #tpu.memory_space<vmem>>, vector<64x8xf32>
    %c0_4 = arith.constant 0 : index
    %c0_5 = arith.constant 0 : index
    %5 = vector.load %arg1[%c0_4, %c0_5] : memref<424x128xf32, #tpu.memory_space<vmem>>, vector<8x8xf32>
    %cst_6 = arith.constant dense<0.000000e+00> : vector<64x8xf32>
    %6 = tpu.matmul %4, %5, %cst_6 {dimension_numbers = #tpu.dot_dimension_numbers<[1], [0], [0], [1], [0, 0, 1, 1], [], []>} : vector<64x8xf32>, vector<8x8xf32>, vector<64x8xf32> -> vector<64x8xf32>
    %c24 = arith.constant 24 : index
    %c0_7 = arith.constant 0 : index
    %7 = vector.load %arg1[%c24, %c0_7] : memref<424x128xf32, #tpu.memory_space<vmem>>, vector<1x8xf32>
    %8 = vector.broadcast %7 : vector<1x8xf32> to vector<64x8xf32>
    %9 = arith.addf %6, %8 : vector<64x8xf32>
    %c1 = arith.constant 1 : index
    %c0_8 = arith.constant 0 : index
    %10 = vector.load %arg0[%c1, %c0_8] : memref<72x8xf32, #tpu.memory_space<vmem>>, vector<64x8xf32>
    %c8 = arith.constant 8 : index
    %c0_9 = arith.constant 0 : index
    %11 = vector.load %arg1[%c8, %c0_9] : memref<424x128xf32, #tpu.memory_space<vmem>>, vector<8x8xf32>
    %cst_10 = arith.constant dense<0.000000e+00> : vector<64x8xf32>
    %12 = tpu.matmul %10, %11, %cst_10 {dimension_numbers = #tpu.dot_dimension_numbers<[1], [0], [0], [1], [0, 0, 1, 1], [], []>} : vector<64x8xf32>, vector<8x8xf32>, vector<64x8xf32> -> vector<64x8xf32>
    %13 = arith.addf %9, %12 : vector<64x8xf32>
    %c2 = arith.constant 2 : index
    %c0_11 = arith.constant 0 : index
    %14 = vector.load %arg0[%c2, %c0_11] : memref<72x8xf32, #tpu.memory_space<vmem>>, vector<64x8xf32>
    %c16 = arith.constant 16 : index
    %c0_12 = arith.constant 0 : index
    %15 = vector.load %arg1[%c16, %c0_12] : memref<424x128xf32, #tpu.memory_space<vmem>>, vector<8x8xf32>
    %cst_13 = arith.constant dense<0.000000e+00> : vector<64x8xf32>
    %16 = tpu.matmul %14, %15, %cst_13 {dimension_numbers = #tpu.dot_dimension_numbers<[1], [0], [0], [1], [0, 0, 1, 1], [], []>} : vector<64x8xf32>, vector<8x8xf32>, vector<64x8xf32> -> vector<64x8xf32>
    %17 = arith.addf %13, %16 : vector<64x8xf32>
    %cst_14 = arith.constant 0.000000e+00 : f32
    %18 = vector.broadcast %cst_14 : f32 to vector<64x8xf32>
    %19 = arith.maximumf %17, %18 : vector<64x8xf32>
    %c0_15 = arith.constant 0 : index
    %c0_16 = arith.constant 0 : index
    %20 = vector.load %arg3[%c0_15, %c0_16] : memref<72x8xf32, #tpu.memory_space<vmem>>, vector<64x8xf32>
    tpu.vector_store %arg3[%c0_15, %c0_16], %19 {strides = array<i32>} : memref<72x8xf32, #tpu.memory_space<vmem>>, vector<64x8xf32>,
    %c0_17 = arith.constant 0 : index
    %c0_18 = arith.constant 0 : index
    %21 = tpu.strided_load %arg3[%c0_17, %c0_18] {strides = array<i32: 2, 1>} : memref<72x8xf32, #tpu.memory_space<vmem>>, vector<32x8xf32>
    %c32_19 = arith.constant 32 : index
    %c0_20 = arith.constant 0 : index
    %22 = vector.load %arg1[%c32_19, %c0_20] : memref<424x128xf32, #tpu.memory_space<vmem>>, vector<8x16xf32>
    %cst_21 = arith.constant dense<0.000000e+00> : vector<32x16xf32>
    %23 = tpu.matmul %21, %22, %cst_21 {dimension_numbers = #tpu.dot_dimension_numbers<[1], [0], [0], [1], [0, 0, 1, 1], [], []>} : vector<32x8xf32>, vector<8x16xf32>, vector<32x16xf32> -> vector<32x16xf32>
    %c56 = arith.constant 56 : index
    %c0_22 = arith.constant 0 : index
    %24 = vector.load %arg1[%c56, %c0_22] : memref<424x128xf32, #tpu.memory_space<vmem>>, vector<1x16xf32>
    %25 = vector.broadcast %24 : vector<1x16xf32> to vector<32x16xf32>
    %26 = arith.addf %23, %25 : vector<32x16xf32>
    %c1_23 = arith.constant 1 : index
    %c0_24 = arith.constant 0 : index
    %27 = tpu.strided_load %arg3[%c1_23, %c0_24] {strides = array<i32: 2, 1>} : memref<72x8xf32, #tpu.memory_space<vmem>>, vector<32x8xf32>
    %c40 = arith.constant 40 : index
    %c0_25 = arith.constant 0 : index
    %28 = vector.load %arg1[%c40, %c0_25] : memref<424x128xf32, #tpu.memory_space<vmem>>, vector<8x16xf32>
    %cst_26 = arith.constant dense<0.000000e+00> : vector<32x16xf32>
    %29 = tpu.matmul %27, %28, %cst_26 {dimension_numbers = #tpu.dot_dimension_numbers<[1], [0], [0], [1], [0, 0, 1, 1], [], []>} : vector<32x8xf32>, vector<8x16xf32>, vector<32x16xf32> -> vector<32x16xf32>
    %30 = arith.addf %26, %29 : vector<32x16xf32>
    %c2_27 = arith.constant 2 : index
    %c0_28 = arith.constant 0 : index
    %31 = tpu.strided_load %arg3[%c2_27, %c0_28] {strides = array<i32: 2, 1>} : memref<72x8xf32, #tpu.memory_space<vmem>>, vector<32x8xf32>
    %c48 = arith.constant 48 : index
    %c0_29 = arith.constant 0 : index
    %32 = vector.load %arg1[%c48, %c0_29] : memref<424x128xf32, #tpu.memory_space<vmem>>, vector<8x16xf32>
    %cst_30 = arith.constant dense<0.000000e+00> : vector<32x16xf32>
    %33 = tpu.matmul %31, %32, %cst_30 {dimension_numbers = #tpu.dot_dimension_numbers<[1], [0], [0], [1], [0, 0, 1, 1], [], []>} : vector<32x8xf32>, vector<8x16xf32>, vector<32x16xf32> -> vector<32x16xf32>
    %34 = arith.addf %30, %33 : vector<32x16xf32>
    %cst_31 = arith.constant 0.000000e+00 : f32
    %35 = vector.broadcast %cst_31 : f32 to vector<32x16xf32>
    %36 = arith.maximumf %34, %35 : vector<32x16xf32>
    %c0_32 = arith.constant 0 : index
    %c0_33 = arith.constant 0 : index
    %37 = vector.load %arg4[%c0_32, %c0_33] : memref<40x16xf32, #tpu.memory_space<vmem>>, vector<32x16xf32>
    tpu.vector_store %arg4[%c0_32, %c0_33], %36 {strides = array<i32>} : memref<40x16xf32, #tpu.memory_space<vmem>>, vector<32x16xf32>,
    %c0_34 = arith.constant 0 : index
    %c0_35 = arith.constant 0 : index
    %38 = tpu.strided_load %arg4[%c0_34, %c0_35] {strides = array<i32: 2, 1>} : memref<40x16xf32, #tpu.memory_space<vmem>>, vector<16x16xf32>
    %c64_36 = arith.constant 64 : index
    %c0_37 = arith.constant 0 : index
    %39 = vector.load %arg1[%c64_36, %c0_37] : memref<424x128xf32, #tpu.memory_space<vmem>>, vector<16x32xf32>
    %cst_38 = arith.constant dense<0.000000e+00> : vector<16x32xf32>
    %40 = tpu.matmul %38, %39, %cst_38 {dimension_numbers = #tpu.dot_dimension_numbers<[1], [0], [0], [1], [0, 0, 1, 1], [], []>} : vector<16x16xf32>, vector<16x32xf32>, vector<16x32xf32> -> vector<16x32xf32>
    %c112 = arith.constant 112 : index
    %c0_39 = arith.constant 0 : index
    %41 = vector.load %arg1[%c112, %c0_39] : memref<424x128xf32, #tpu.memory_space<vmem>>, vector<1x32xf32>
    %42 = vector.broadcast %41 : vector<1x32xf32> to vector<16x32xf32>
    %43 = arith.addf %40, %42 : vector<16x32xf32>
    %c1_40 = arith.constant 1 : index
    %c0_41 = arith.constant 0 : index
    %44 = tpu.strided_load %arg4[%c1_40, %c0_41] {strides = array<i32: 2, 1>} : memref<40x16xf32, #tpu.memory_space<vmem>>, vector<16x16xf32>
    %c80 = arith.constant 80 : index
    %c0_42 = arith.constant 0 : index
    %45 = vector.load %arg1[%c80, %c0_42] : memref<424x128xf32, #tpu.memory_space<vmem>>, vector<16x32xf32>
    %cst_43 = arith.constant dense<0.000000e+00> : vector<16x32xf32>
    %46 = tpu.matmul %44, %45, %cst_43 {dimension_numbers = #tpu.dot_dimension_numbers<[1], [0], [0], [1], [0, 0, 1, 1], [], []>} : vector<16x16xf32>, vector<16x32xf32>, vector<16x32xf32> -> vector<16x32xf32>
    %47 = arith.addf %43, %46 : vector<16x32xf32>
    %c2_44 = arith.constant 2 : index
    %c0_45 = arith.constant 0 : index
    %48 = tpu.strided_load %arg4[%c2_44, %c0_45] {strides = array<i32: 2, 1>} : memref<40x16xf32, #tpu.memory_space<vmem>>, vector<16x16xf32>
    %c96 = arith.constant 96 : index
    %c0_46 = arith.constant 0 : index
    %49 = vector.load %arg1[%c96, %c0_46] : memref<424x128xf32, #tpu.memory_space<vmem>>, vector<16x32xf32>
    %cst_47 = arith.constant dense<0.000000e+00> : vector<16x32xf32>
    %50 = tpu.matmul %48, %49, %cst_47 {dimension_numbers = #tpu.dot_dimension_numbers<[1], [0], [0], [1], [0, 0, 1, 1], [], []>} : vector<16x16xf32>, vector<16x32xf32>, vector<16x32xf32> -> vector<16x32xf32>
    %51 = arith.addf %47, %50 : vector<16x32xf32>
    %cst_48 = arith.constant 0.000000e+00 : f32
    %52 = vector.broadcast %cst_48 : f32 to vector<16x32xf32>
    %53 = arith.maximumf %51, %52 : vector<16x32xf32>
    %c0_49 = arith.constant 0 : index
    %c0_50 = arith.constant 0 : index
    %54 = vector.load %arg5[%c0_49, %c0_50] : memref<16x32xf32, #tpu.memory_space<vmem>>, vector<16x32xf32>
    tpu.vector_store %arg5[%c0_49, %c0_50], %53 {strides = array<i32>} : memref<16x32xf32, #tpu.memory_space<vmem>>, vector<16x32xf32>,
    %c0_51 = arith.constant 0 : index
    %c0_52 = arith.constant 0 : index
    %55 = tpu.strided_load %arg5[%c0_51, %c0_52] {strides = array<i32: 8, 1>} : memref<16x32xf32, #tpu.memory_space<vmem>>, vector<2x32xf32>
    %c0_53 = arith.constant 0 : index
    %c0_54 = arith.constant 0 : index
    %56 = vector.load %arg6[%c0_53, %c0_54] : memref<2x192xf32, #tpu.memory_space<vmem>>, vector<2x32xf32>
    tpu.vector_store %arg6[%c0_53, %c0_54], %55 {strides = array<i32>} : memref<2x192xf32, #tpu.memory_space<vmem>>, vector<2x32xf32>,
    %c1_55 = arith.constant 1 : index
    %c0_56 = arith.constant 0 : index
    %57 = tpu.strided_load %arg5[%c1_55, %c0_56] {strides = array<i32: 8, 1>} : memref<16x32xf32, #tpu.memory_space<vmem>>, vector<2x32xf32>
    %c0_57 = arith.constant 0 : index
    %c32_58 = arith.constant 32 : index
    %58 = vector.load %arg6[%c0_57, %c32_58] : memref<2x192xf32, #tpu.memory_space<vmem>>, vector<2x32xf32>
    tpu.vector_store %arg6[%c0_57, %c32_58], %57 {strides = array<i32>} : memref<2x192xf32, #tpu.memory_space<vmem>>, vector<2x32xf32>,
    %c2_59 = arith.constant 2 : index
    %c0_60 = arith.constant 0 : index
    %59 = tpu.strided_load %arg5[%c2_59, %c0_60] {strides = array<i32: 8, 1>} : memref<16x32xf32, #tpu.memory_space<vmem>>, vector<2x32xf32>
    %c0_61 = arith.constant 0 : index
    %c64_62 = arith.constant 64 : index
    %60 = vector.load %arg6[%c0_61, %c64_62] : memref<2x192xf32, #tpu.memory_space<vmem>>, vector<2x32xf32>
    tpu.vector_store %arg6[%c0_61, %c64_62], %59 {strides = array<i32>} : memref<2x192xf32, #tpu.memory_space<vmem>>, vector<2x32xf32>,
    %c3 = arith.constant 3 : index
    %c0_63 = arith.constant 0 : index
    %61 = tpu.strided_load %arg5[%c3, %c0_63] {strides = array<i32: 8, 1>} : memref<16x32xf32, #tpu.memory_space<vmem>>, vector<2x32xf32>
    %c0_64 = arith.constant 0 : index
    %c96_65 = arith.constant 96 : index
    %62 = vector.load %arg6[%c0_64, %c96_65] : memref<2x192xf32, #tpu.memory_space<vmem>>, vector<2x32xf32>
    tpu.vector_store %arg6[%c0_64, %c96_65], %61 {strides = array<i32>} : memref<2x192xf32, #tpu.memory_space<vmem>>, vector<2x32xf32>,
    %c4 = arith.constant 4 : index
    %c0_66 = arith.constant 0 : index
    %63 = tpu.strided_load %arg5[%c4, %c0_66] {strides = array<i32: 8, 1>} : memref<16x32xf32, #tpu.memory_space<vmem>>, vector<2x32xf32>
    %c0_67 = arith.constant 0 : index
    %c128 = arith.constant 128 : index
    %64 = vector.load %arg6[%c0_67, %c128] : memref<2x192xf32, #tpu.memory_space<vmem>>, vector<2x32xf32>
    tpu.vector_store %arg6[%c0_67, %c128], %63 {strides = array<i32>} : memref<2x192xf32, #tpu.memory_space<vmem>>, vector<2x32xf32>,
    %c5 = arith.constant 5 : index
    %c0_68 = arith.constant 0 : index
    %65 = tpu.strided_load %arg5[%c5, %c0_68] {strides = array<i32: 8, 1>} : memref<16x32xf32, #tpu.memory_space<vmem>>, vector<2x32xf32>
    %c0_69 = arith.constant 0 : index
    %c160 = arith.constant 160 : index
    %66 = vector.load %arg6[%c0_69, %c160] : memref<2x192xf32, #tpu.memory_space<vmem>>, vector<2x32xf32>
    tpu.vector_store %arg6[%c0_69, %c160], %65 {strides = array<i32>} : memref<2x192xf32, #tpu.memory_space<vmem>>, vector<2x32xf32>,
    %c0_70 = arith.constant 0 : index
    %c0_71 = arith.constant 0 : index
    %67 = vector.load %arg6[%c0_70, %c0_71] : memref<2x192xf32, #tpu.memory_space<vmem>>, vector<2x192xf32>
    %c120 = arith.constant 120 : index
    %c0_72 = arith.constant 0 : index
    %68 = vector.load %arg1[%c120, %c0_72] : memref<424x128xf32, #tpu.memory_space<vmem>>, vector<192x96xf32>
    %cst_73 = arith.constant dense<0.000000e+00> : vector<2x96xf32>
    %69 = tpu.matmul %67, %68, %cst_73 {dimension_numbers = #tpu.dot_dimension_numbers<[1], [0], [0], [1], [0, 0, 1, 1], [], []>} : vector<2x192xf32>, vector<192x96xf32>, vector<2x96xf32> -> vector<2x96xf32>
    %c312 = arith.constant 312 : index
    %c0_74 = arith.constant 0 : index
    %70 = vector.load %arg1[%c312, %c0_74] : memref<424x128xf32, #tpu.memory_space<vmem>>, vector<1x96xf32>
    %71 = vector.broadcast %70 : vector<1x96xf32> to vector<2x96xf32>
    %72 = arith.addf %69, %71 : vector<2x96xf32>
    %cst_75 = arith.constant 0.000000e+00 : f32
    %73 = vector.broadcast %cst_75 : f32 to vector<2x96xf32>
    %74 = arith.maximumf %72, %73 : vector<2x96xf32>
    %c320 = arith.constant 320 : index
    %c0_76 = arith.constant 0 : index
    %75 = vector.load %arg1[%c320, %c0_76] : memref<424x128xf32, #tpu.memory_space<vmem>>, vector<96x6xf32>
    %cst_77 = arith.constant dense<0.000000e+00> : vector<2x6xf32>
    %76 = tpu.matmul %74, %75, %cst_77 {dimension_numbers = #tpu.dot_dimension_numbers<[1], [0], [0], [1], [0, 0, 1, 1], [], []>} : vector<2x96xf32>, vector<96x6xf32>, vector<2x6xf32> -> vector<2x6xf32>
    %c416 = arith.constant 416 : index
    %c0_78 = arith.constant 0 : index
    %77 = vector.load %arg1[%c416, %c0_78] : memref<424x128xf32, #tpu.memory_space<vmem>>, vector<1x6xf32>
    %78 = vector.broadcast %77 : vector<1x6xf32> to vector<2x6xf32>
    %79 = arith.addf %76, %78 : vector<2x6xf32>
    %cst_79 = arith.constant 0.000000e+00 : f32
    %80 = vector.broadcast %cst_79 : f32 to vector<2x6xf32>
    %81 = arith.maximumf %79, %80 : vector<2x6xf32>
    %c0_80 = arith.constant 0 : index
    %c0_81 = arith.constant 0 : index
    %82 = vector.load %arg2[%c0_80, %c0_81] : memref<2x6xf32, #tpu.memory_space<vmem>>, vector<2x6xf32>
    tpu.vector_store %arg2[%c0_80, %c0_81], %81 {strides = array<i32>} : memref<2x6xf32, #tpu.memory_space<vmem>>, vector<2x6xf32>,
    return
  }
}

</mosaic_0001>

<llo_original>
// kernel: forward.1
$region0: #{forward.1}
  #allocation0 [shape = 'u32[]', space=smem, size = 0x4, offset = 0x4, fixed_abs, tag = 'smem constant byte address 0x4 - core index']
  #allocation1 [shape = 'u32[144,128]{1,0:T(1,128)}', space=vmem, size = 0x12000, scoped, tag = 'internal scratch']
  #allocation2 [shape = 'f32[72,8]{1,0:T(8,128)}', space=vmem, size = 0x9000, scoped, tag = 'scratch operand']
  #allocation3 [shape = 'f32[40,16]{1,0:T(8,128)}', space=vmem, size = 0x5000, scoped, tag = 'scratch operand']
  #allocation4 [shape = 'f32[16,32]{1,0:T(8,128)}', space=vmem, size = 0x2000, scoped, tag = 'scratch operand']
  #allocation5 [shape = 'f32[2,192]{1,0:T(2,128)}', space=vmem, size = 0x800, scoped, tag = 'scratch operand']
  %s0 = inlined_call_operand.vmem [shape: f32[72,8], index: 0, kind: input, shape index: {}]
  %s1 = inlined_call_operand.vmem [shape: f32[424,128], index: 1, kind: input, shape index: {}]
  %s2 = inlined_call_operand.vmem [shape: f32[2,6], index: 2, kind: output, shape index: {}]
  %s3 = sld [smem:[#allocation0]]
  $region18: #{forward.1} parent=0
    _
  %s5 = ssub.s32 1, %s3
  %s6 = scalar_select 0, %s5, %s3
  // Predicated region
  $region2: #{forward.1} parent=0 // pred_check
    _
  $region3: #{forward.1} parent=0 // pred_check_branch
    %8 = sbr.rel (0) target = $region5
  $region4: #{forward.1} parent=0 // pred_region
    _
  $region5: #{forward.1} parent=0 // pred_fallthru
    _
  // Predicated region
  $region6: #{forward.1} parent=0 // pred_check
    _
  $region7: #{forward.1} parent=0 // pred_check_branch
    %10 = sbr.rel (0) target = $region9
  $region8: #{forward.1} parent=0 // pred_region
    _
  $region9: #{forward.1} parent=0 // pred_fallthru
    _
  %vm11 = vcmask 64512
  %12 = vst.msk [vmem:[#allocation2 + $0x40] sm:$0xff] %vm11, 0.0
  %vm13 = vcmask 130048
  %14 = vst.msk [vmem:[#allocation3 + $0x20] sm:$0xff] %vm13, 0.0
  %v15 = vld [vmem:[%s0] sm:$0xff]
  %v16 = vld [vmem:[%s0 + $0x8] sm:$0xff]
  %v17 = vld [vmem:[%s0 + $0x10] sm:$0xff]
  %v18 = vld [vmem:[%s0 + $0x18] sm:$0xff]
  %v19 = vld [vmem:[%s0 + $0x20] sm:$0xff]
  %v20 = vld [vmem:[%s0 + $0x28] sm:$0xff]
  %v21 = vld [vmem:[%s0 + $0x30] sm:$0xff]
  %v22 = vld [vmem:[%s0 + $0x38] sm:$0xff]
  %v23 = vld [vmem:[%s1] sm:$0xff]
  %v24 = vld [vmem:[%s1 + $0x18] sm:$0x1]
  %v25 = vlaneseq
  %v26 = vshrl.u32 %v25, 7
  %v27 = vsub.s32 0, %v26
  %v28 = vrot.slane %v24, %v27
  %v30 = vsel %vm11, %v15, 0
  %v33 = vsel %vm11, %v16, 0
  %v36 = vsel %vm11, %v17, 0
  %v39 = vsel %vm11, %v18, 0
  %v42 = vsel %vm11, %v19, 0
  %v45 = vsel %vm11, %v20, 0
  %v48 = vsel %vm11, %v21, 0
  %v51 = vsel %vm11, %v22, 0
  %53 = vmatprep.subr.mxu0 0.0
  %54 = vmatpush1.msra.mxu0 0.0
  %55 = vmatprep.subr.mxu0 0.0
  %56 = vmatpush1.msra.mxu0 0.0
  %57 = vmatprep.subr.mxu0 0.0
  %58 = vmatpush1.msra.mxu0 0.0
  %59 = vmatprep.subr.mxu0 0.0
  %60 = vmatpush1.msra.mxu0 0.0
  %61 = vmatprep.subr.mxu0 0.0
  %62 = vmatpush1.msra.mxu0 0.0
  %63 = vmatprep.subr.mxu0 0.0
  %64 = vmatpush1.msra.mxu0 0.0
  %65 = vmatprep.subr.mxu0 0.0
  %66 = vmatpush1.msra.mxu0 0.0
  %67 = vmatprep.subr.mxu0 0.0
  %68 = vmatpush1.msra.mxu0 0.0
  %69 = vmatprep.subr.mxu0 0.0
  %70 = vmatpush1.msra.mxu0 0.0
  %71 = vmatprep.subr.mxu0 0.0
  %72 = vmatpush1.msra.mxu0 0.0
  %73 = vmatprep.subr.mxu0 0.0
  %74 = vmatpush1.msra.mxu0 0.0
  %75 = vmatprep.subr.mxu0 0.0
  %76 = vmatpush1.msra.mxu0 0.0
  %77 = vmatprep.subr.mxu0 0.0
  %78 = vmatpush1.msra.mxu0 0.0
  %79 = vmatprep.subr.mxu0 0.0
  %80 = vmatpush1.msra.mxu0 0.0
  %81 = vmatprep.subr.mxu0 0.0
  %82 = vmatpush1.msra.mxu0 0.0
  %83 = vmatprep.subr.mxu0 0.0
  %84 = vmatpush1.msra.mxu0 %v23
  %85 = vmatprep.subr.mxu0 0.0
  %86 = vmatpush2.msra.mxu0 0.0
  %87 = vmatprep.subr.mxu0 0.0
  %88 = vmatpush2.msra.mxu0 0.0
  %89 = vmatprep.subr.mxu0 0.0
  %90 = vmatpush2.msra.mxu0 0.0
  %91 = vmatprep.subr.mxu0 0.0
  %92 = vmatpush2.msra.mxu0 0.0
  %93 = vmatprep.subr.mxu0 0.0
  %94 = vmatpush2.msra.mxu0 0.0
  %95 = vmatprep.subr.mxu0 0.0
  %96 = vmatpush2.msra.mxu0 0.0
  %97 = vmatprep.subr.mxu0 0.0
  %98 = vmatpush2.msra.mxu0 0.0
  %99 = vmatprep.subr.mxu0 0.0
  %100 = vmatpush2.msra.mxu0 0.0
  %101 = vmatprep.subr.mxu0 0.0
  %102 = vmatpush2.msra.mxu0 0.0
  %103 = vmatprep.subr.mxu0 0.0
  %104 = vmatpush2.msra.mxu0 0.0
  %105 = vmatprep.subr.mxu0 0.0
  %106 = vmatpush2.msra.mxu0 0.0
  %107 = vmatprep.subr.mxu0 0.0
  %108 = vmatpush2.msra.mxu0 0.0
  %109 = vmatprep.subr.mxu0 0.0
  %110 = vmatpush2.msra.mxu0 0.0
  %111 = vmatprep.subr.mxu0 0.0
  %112 = vmatpush2.msra.mxu0 0.0
  %113 = vmatprep.subr.mxu0 0.0
  %114 = vmatpush2.msra.mxu0 0.0
  %115 = vmatprep.subr.mxu0 0.0
  %116 = vmatpush2.msra.mxu0 0.0
  %117 = vmatprep.mubr.f32.mxu0 0.0
  %118 = vmatmul.mubr.f32.gmra.mxu0 %v30
  %v119 = vpop.f32.mrf.mxu0
  %v120 = vadd.f32 %v28, %v119
  %v121 = vpop.f32.mrf.mxu0
  %122 = vmatprep.mubr.f32.mxu0 0.0
  %123 = vmatmul.mubr.f32.gmra.mxu0 %v33
  %v124 = vpop.f32.mrf.mxu0
  %v125 = vadd.f32 %v28, %v124
  %v126 = vpop.f32.mrf.mxu0
  %127 = vmatprep.mubr.f32.mxu0 0.0
  %128 = vmatmul.mubr.f32.gmra.mxu0 %v36
  %v129 = vpop.f32.mrf.mxu0
  %v130 = vadd.f32 %v28, %v129
  %v131 = vpop.f32.mrf.mxu0
  %132 = vmatprep.mubr.f32.mxu0 0.0
  %133 = vmatmul.mubr.f32.gmra.mxu0 %v39
  %v134 = vpop.f32.mrf.mxu0
  %v135 = vadd.f32 %v28, %v134
  %v136 = vpop.f32.mrf.mxu0
  %137 = vmatprep.mubr.f32.mxu0 0.0
  %138 = vmatmul.mubr.f32.gmra.mxu0 %v42
  %v139 = vpop.f32.mrf.mxu0
  %v140 = vadd.f32 %v28, %v139
  %v141 = vpop.f32.mrf.mxu0
  %142 = vmatprep.mubr.f32.mxu0 0.0
  %143 = vmatmul.mubr.f32.gmra.mxu0 %v45
  %v144 = vpop.f32.mrf.mxu0
  %v145 = vadd.f32 %v28, %v144
  %v146 = vpop.f32.mrf.mxu0
  %147 = vmatprep.mubr.f32.mxu0 0.0
  %148 = vmatmul.mubr.f32.gmra.mxu0 %v48
  %v149 = vpop.f32.mrf.mxu0
  %v150 = vadd.f32 %v28, %v149
  %v151 = vpop.f32.mrf.mxu0
  %152 = vmatprep.mubr.f32.mxu0 0.0
  %153 = vmatmul.mubr.f32.gmra.mxu0 %v51
  %v154 = vpop.f32.mrf.mxu0
  %v155 = vadd.f32 %v28, %v154
  %v156 = vpop.f32.mrf.mxu0
  %157 = vdwg.mxu0
  %v158 = vld [vmem:[%s0 + $0x1] sm:$0xff]
  %v159 = vld [vmem:[%s0 + $0x9] sm:$0xff]
  %v160 = vld [vmem:[%s0 + $0x11] sm:$0xff]
  %v161 = vld [vmem:[%s0 + $0x19] sm:$0xff]
  %v162 = vld [vmem:[%s0 + $0x21] sm:$0xff]
  %v163 = vld [vmem:[%s0 + $0x29] sm:$0xff]
  %v164 = vld [vmem:[%s0 + $0x31] sm:$0xff]
  %v165 = vld [vmem:[%s0 + $0x39] sm:$0xff]
  %v166 = vld [vmem:[%s1 + $0x8] sm:$0xff]
  %v168 = vsel %vm11, %v158, 0
  %v171 = vsel %vm11, %v159, 0
  %v174 = vsel %vm11, %v160, 0
  %v177 = vsel %vm11, %v161, 0
  %v180 = vsel %vm11, %v162, 0
  %v183 = vsel %vm11, %v163, 0
  %v186 = vsel %vm11, %v164, 0
  %v189 = vsel %vm11, %v165, 0
  %191 = vmatprep.subr.mxu0 0.0
  %192 = vmatpush1.msra.mxu0 0.0
  %193 = vmatprep.subr.mxu0 0.0
  %194 = vmatpush1.msra.mxu0 0.0
  %195 = vmatprep.subr.mxu0 0.0
  %196 = vmatpush1.msra.mxu0 0.0
  %197 = vmatprep.subr.mxu0 0.0
  %198 = vmatpush1.msra.mxu0 0.0
  %199 = vmatprep.subr.mxu0 0.0
  %200 = vmatpush1.msra.mxu0 0.0
  %201 = vmatprep.subr.mxu0 0.0
  %202 = vmatpush1.msra.mxu0 0.0
  %203 = vmatprep.subr.mxu0 0.0
  %204 = vmatpush1.msra.mxu0 0.0
  %205 = vmatprep.subr.mxu0 0.0
  %206 = vmatpush1.msra.mxu0 0.0
  %207 = vmatprep.subr.mxu0 0.0
  %208 = vmatpush1.msra.mxu0 0.0
  %209 = vmatprep.subr.mxu0 0.0
  %210 = vmatpush1.msra.mxu0 0.0
  %211 = vmatprep.subr.mxu0 0.0
  %212 = vmatpush1.msra.mxu0 0.0
  %213 = vmatprep.subr.mxu0 0.0
  %214 = vmatpush1.msra.mxu0 0.0
  %215 = vmatprep.subr.mxu0 0.0
  %216 = vmatpush1.msra.mxu0 0.0
  %217 = vmatprep.subr.mxu0 0.0
  %218 = vmatpush1.msra.mxu0 0.0
  %219 = vmatprep.subr.mxu0 0.0
  %220 = vmatpush1.msra.mxu0 0.0
  %221 = vmatprep.subr.mxu0 0.0
  %222 = vmatpush1.msra.mxu0 %v166
  %223 = vmatprep.subr.mxu0 0.0
  %224 = vmatpush2.msra.mxu0 0.0
  %225 = vmatprep.subr.mxu0 0.0
  %226 = vmatpush2.msra.mxu0 0.0
  %227 = vmatprep.subr.mxu0 0.0
  %228 = vmatpush2.msra.mxu0 0.0
  %229 = vmatprep.subr.mxu0 0.0
  %230 = vmatpush2.msra.mxu0 0.0
  %231 = vmatprep.subr.mxu0 0.0
  %232 = vmatpush2.msra.mxu0 0.0
  %233 = vmatprep.subr.mxu0 0.0
  %234 = vmatpush2.msra.mxu0 0.0
  %235 = vmatprep.subr.mxu0 0.0
  %236 = vmatpush2.msra.mxu0 0.0
  %237 = vmatprep.subr.mxu0 0.0
  %238 = vmatpush2.msra.mxu0 0.0
  %239 = vmatprep.subr.mxu0 0.0
  %240 = vmatpush2.msra.mxu0 0.0
  %241 = vmatprep.subr.mxu0 0.0
  %242 = vmatpush2.msra.mxu0 0.0
  %243 = vmatprep.subr.mxu0 0.0
  %244 = vmatpush2.msra.mxu0 0.0
  %245 = vmatprep.subr.mxu0 0.0
  %246 = vmatpush2.msra.mxu0 0.0
  %247 = vmatprep.subr.mxu0 0.0
  %248 = vmatpush2.msra.mxu0 0.0
  %249 = vmatprep.subr.mxu0 0.0
  %250 = vmatpush2.msra.mxu0 0.0
  %251 = vmatprep.subr.mxu0 0.0
  %252 = vmatpush2.msra.mxu0 0.0
  %253 = vmatprep.subr.mxu0 0.0
  %254 = vmatpush2.msra.mxu0 0.0
  %255 = vmatprep.mubr.f32.mxu0 0.0
  %256 = vmatmul.mubr.f32.gmra.mxu0 %v168
  %v257 = vpop.f32.mrf.mxu0
  %v258 = vadd.f32 0.0, %v257
  %v259 = vpop.f32.mrf.mxu0
  %260 = vmatprep.mubr.f32.mxu0 0.0
  %261 = vmatmul.mubr.f32.gmra.mxu0 %v171
  %v262 = vpop.f32.mrf.mxu0
  %v263 = vadd.f32 0.0, %v262
  %v264 = vpop.f32.mrf.mxu0
  %265 = vmatprep.mubr.f32.mxu0 0.0
  %266 = vmatmul.mubr.f32.gmra.mxu0 %v174
  %v267 = vpop.f32.mrf.mxu0
  %v268 = vadd.f32 0.0, %v267
  %v269 = vpop.f32.mrf.mxu0
  %270 = vmatprep.mubr.f32.mxu0 0.0
  %271 = vmatmul.mubr.f32.gmra.mxu0 %v177
  %v272 = vpop.f32.mrf.mxu0
  %v273 = vadd.f32 0.0, %v272
  %v274 = vpop.f32.mrf.mxu0
  %275 = vmatprep.mubr.f32.mxu0 0.0
  %276 = vmatmul.mubr.f32.gmra.mxu0 %v180
  %v277 = vpop.f32.mrf.mxu0
  %v278 = vadd.f32 0.0, %v277
  %v279 = vpop.f32.mrf.mxu0
  %280 = vmatprep.mubr.f32.mxu0 0.0
  %281 = vmatmul.mubr.f32.gmra.mxu0 %v183
  %v282 = vpop.f32.mrf.mxu0
  %v283 = vadd.f32 0.0, %v282
  %v284 = vpop.f32.mrf.mxu0
  %285 = vmatprep.mubr.f32.mxu0 0.0
  %286 = vmatmul.mubr.f32.gmra.mxu0 %v186
  %v287 = vpop.f32.mrf.mxu0
  %v288 = vadd.f32 0.0, %v287
  %v289 = vpop.f32.mrf.mxu0
  %290 = vmatprep.mubr.f32.mxu0 0.0
  %291 = vmatmul.mubr.f32.gmra.mxu0 %v189
  %v292 = vpop.f32.mrf.mxu0
  %v293 = vadd.f32 0.0, %v292
  %v294 = vpop.f32.mrf.mxu0
  %295 = vdwg.mxu0
  %v296 = vadd.f32 %v120, %v258
  %v297 = vadd.f32 %v125, %v263
  %v298 = vadd.f32 %v130, %v268
  %v299 = vadd.f32 %v135, %v273
  %v300 = vadd.f32 %v140, %v278
  %v301 = vadd.f32 %v145, %v283
  %v302 = vadd.f32 %v150, %v288
  %v303 = vadd.f32 %v155, %v293
  %v304 = vld [vmem:[%s0 + $0x2] sm:$0xff]
  %v305 = vld [vmem:[%s0 + $0xa] sm:$0xff]
  %v306 = vld [vmem:[%s0 + $0x12] sm:$0xff]
  %v307 = vld [vmem:[%s0 + $0x1a] sm:$0xff]
  %v308 = vld [vmem:[%s0 + $0x22] sm:$0xff]
  %v309 = vld [vmem:[%s0 + $0x2a] sm:$0xff]
  %v310 = vld [vmem:[%s0 + $0x32] sm:$0xff]
  %v311 = vld [vmem:[%s0 + $0x3a] sm:$0xff]
  %v312 = vld [vmem:[%s1 + $0x10] sm:$0xff]
  %v314 = vsel %vm11, %v304, 0
  %v317 = vsel %vm11, %v305, 0
  %v320 = vsel %vm11, %v306, 0
  %v323 = vsel %vm11, %v307, 0
  %v326 = vsel %vm11, %v308, 0
  %v329 = vsel %vm11, %v309, 0
  %v332 = vsel %vm11, %v310, 0
  %v335 = vsel %vm11, %v311, 0
  %337 = vmatprep.subr.mxu0 0.0
  %338 = vmatpush1.msra.mxu0 0.0
  %339 = vmatprep.subr.mxu0 0.0
  %340 = vmatpush1.msra.mxu0 0.0
  %341 = vmatprep.subr.mxu0 0.0
  %342 = vmatpush1.msra.mxu0 0.0
  %343 = vmatprep.subr.mxu0 0.0
  %344 = vmatpush1.msra.mxu0 0.0
  %345 = vmatprep.subr.mxu0 0.0
  %346 = vmatpush1.msra.mxu0 0.0
  %347 = vmatprep.subr.mxu0 0.0
  %348 = vmatpush1.msra.mxu0 0.0
  %349 = vmatprep.subr.mxu0 0.0
  %350 = vmatpush1.msra.mxu0 0.0
  %351 = vmatprep.subr.mxu0 0.0
  %352 = vmatpush1.msra.mxu0 0.0
  %353 = vmatprep.subr.mxu0 0.0
  %354 = vmatpush1.msra.mxu0 0.0
  %355 = vmatprep.subr.mxu0 0.0
  %356 = vmatpush1.msra.mxu0 0.0
  %357 = vmatprep.subr.mxu0 0.0
  %358 = vmatpush1.msra.mxu0 0.0
  %359 = vmatprep.subr.mxu0 0.0
  %360 = vmatpush1.msra.mxu0 0.0
  %361 = vmatprep.subr.mxu0 0.0
  %362 = vmatpush1.msra.mxu0 0.0
  %363 = vmatprep.subr.mxu0 0.0
  %364 = vmatpush1.msra.mxu0 0.0
  %365 = vmatprep.subr.mxu0 0.0
  %366 = vmatpush1.msra.mxu0 0.0
  %367 = vmatprep.subr.mxu0 0.0
  %368 = vmatpush1.msra.mxu0 %v312
  %369 = vmatprep.subr.mxu0 0.0
  %370 = vmatpush2.msra.mxu0 0.0
  %371 = vmatprep.subr.mxu0 0.0
  %372 = vmatpush2.msra.mxu0 0.0
  %373 = vmatprep.subr.mxu0 0.0
  %374 = vmatpush2.msra.mxu0 0.0
  %375 = vmatprep.subr.mxu0 0.0
  %376 = vmatpush2.msra.mxu0 0.0
  %377 = vmatprep.subr.mxu0 0.0
  %378 = vmatpush2.msra.mxu0 0.0
  %379 = vmatprep.subr.mxu0 0.0
  %380 = vmatpush2.msra.mxu0 0.0
  %381 = vmatprep.subr.mxu0 0.0
  %382 = vmatpush2.msra.mxu0 0.0
  %383 = vmatprep.subr.mxu0 0.0
  %384 = vmatpush2.msra.mxu0 0.0
  %385 = vmatprep.subr.mxu0 0.0
  %386 = vmatpush2.msra.mxu0 0.0
  %387 = vmatprep.subr.mxu0 0.0
  %388 = vmatpush2.msra.mxu0 0.0
  %389 = vmatprep.subr.mxu0 0.0
  %390 = vmatpush2.msra.mxu0 0.0
  %391 = vmatprep.subr.mxu0 0.0
  %392 = vmatpush2.msra.mxu0 0.0
  %393 = vmatprep.subr.mxu0 0.0
  %394 = vmatpush2.msra.mxu0 0.0
  %395 = vmatprep.subr.mxu0 0.0
  %396 = vmatpush2.msra.mxu0 0.0
  %397 = vmatprep.subr.mxu0 0.0
  %398 = vmatpush2.msra.mxu0 0.0
  %399 = vmatprep.subr.mxu0 0.0
  %400 = vmatpush2.msra.mxu0 0.0
  %401 = vmatprep.mubr.f32.mxu0 0.0
  %402 = vmatmul.mubr.f32.gmra.mxu0 %v314
  %v403 = vpop.f32.mrf.mxu0
  %v404 = vadd.f32 0.0, %v403
  %v405 = vpop.f32.mrf.mxu0
  %406 = vmatprep.mubr.f32.mxu0 0.0
  %407 = vmatmul.mubr.f32.gmra.mxu0 %v317
  %v408 = vpop.f32.mrf.mxu0
  %v409 = vadd.f32 0.0, %v408
  %v410 = vpop.f32.mrf.mxu0
  %411 = vmatprep.mubr.f32.mxu0 0.0
  %412 = vmatmul.mubr.f32.gmra.mxu0 %v320
  %v413 = vpop.f32.mrf.mxu0
  %v414 = vadd.f32 0.0, %v413
  %v415 = vpop.f32.mrf.mxu0
  %416 = vmatprep.mubr.f32.mxu0 0.0
  %417 = vmatmul.mubr.f32.gmra.mxu0 %v323
  %v418 = vpop.f32.mrf.mxu0
  %v419 = vadd.f32 0.0, %v418
  %v420 = vpop.f32.mrf.mxu0
  %421 = vmatprep.mubr.f32.mxu0 0.0
  %422 = vmatmul.mubr.f32.gmra.mxu0 %v326
  %v423 = vpop.f32.mrf.mxu0
  %v424 = vadd.f32 0.0, %v423
  %v425 = vpop.f32.mrf.mxu0
  %426 = vmatprep.mubr.f32.mxu0 0.0
  %427 = vmatmul.mubr.f32.gmra.mxu0 %v329
  %v428 = vpop.f32.mrf.mxu0
  %v429 = vadd.f32 0.0, %v428
  %v430 = vpop.f32.mrf.mxu0
  %431 = vmatprep.mubr.f32.mxu0 0.0
  %432 = vmatmul.mubr.f32.gmra.mxu0 %v332
  %v433 = vpop.f32.mrf.mxu0
  %v434 = vadd.f32 0.0, %v433
  %v435 = vpop.f32.mrf.mxu0
  %436 = vmatprep.mubr.f32.mxu0 0.0
  %437 = vmatmul.mubr.f32.gmra.mxu0 %v335
  %v438 = vpop.f32.mrf.mxu0
  %v439 = vadd.f32 0.0, %v438
  %v440 = vpop.f32.mrf.mxu0
  %441 = vdwg.mxu0
  %v442 = vadd.f32 %v296, %v404
  %v443 = vadd.f32 %v297, %v409
  %v444 = vadd.f32 %v298, %v414
  %v445 = vadd.f32 %v299, %v419
  %v446 = vadd.f32 %v300, %v424
  %v447 = vadd.f32 %v301, %v429
  %v448 = vadd.f32 %v302, %v434
  %v449 = vadd.f32 %v303, %v439
  %v450 = vmax.f32 %v442, 0.0
  %v451 = vmax.f32 %v443, 0.0
  %v452 = vmax.f32 %v444, 0.0
  %v453 = vmax.f32 %v445, 0.0
  %v454 = vmax.f32 %v446, 0.0
  %v455 = vmax.f32 %v447, 0.0
  %v456 = vmax.f32 %v448, 0.0
  %v457 = vmax.f32 %v449, 0.0
  %458 = vst.msk [vmem:[#allocation2] sm:$0xff] %vm11, %v450
  %459 = vst.msk [vmem:[#allocation2 + $0x8] sm:$0xff] %vm11, %v451
  %460 = vst.msk [vmem:[#allocation2 + $0x10] sm:$0xff] %vm11, %v452
  %461 = vst.msk [vmem:[#allocation2 + $0x18] sm:$0xff] %vm11, %v453
  %462 = vst.msk [vmem:[#allocation2 + $0x20] sm:$0xff] %vm11, %v454
  %463 = vst.msk [vmem:[#allocation2 + $0x28] sm:$0xff] %vm11, %v455
  %464 = vst.msk [vmem:[#allocation2 + $0x30] sm:$0xff] %vm11, %v456
  %465 = vst.msk [vmem:[#allocation2 + $0x38] sm:$0xff] %vm11, %v457
  %v466 = vld [vmem:[#allocation2] ss:$2 sm:$0xff]
  %s467 = scalar_lea.vmem [#allocation2], 16
  %v468 = vld [vmem:[%s467] ss:$2 sm:$0xff]
  %s469 = scalar_lea.vmem [#allocation2], 32
  %v470 = vld [vmem:[%s469] ss:$2 sm:$0xff]
  %s471 = scalar_lea.vmem [#allocation2], 48
  %v472 = vld [vmem:[%s471] ss:$2 sm:$0xff]
  %v473 = vld [vmem:[%s1 + $0x20] sm:$0xff]
  %v474 = vld [vmem:[%s1 + $0x38] sm:$0x1]
  %v475 = vlaneseq
  %v476 = vshrl.u32 %v475, 7
  %v477 = vsub.s32 0, %v476
  %v478 = vrot.slane %v474, %v477
  %v480 = vsel %vm11, %v466, 0
  %v483 = vsel %vm11, %v468, 0
  %v486 = vsel %vm11, %v470, 0
  %v489 = vsel %vm11, %v472, 0
  %491 = vmatprep.subr.mxu0 0.0
  %492 = vmatpush1.msra.mxu0 0.0
  %493 = vmatprep.subr.mxu0 0.0
  %494 = vmatpush1.msra.mxu0 0.0
  %495 = vmatprep.subr.mxu0 0.0
  %496 = vmatpush1.msra.mxu0 0.0
  %497 = vmatprep.subr.mxu0 0.0
  %498 = vmatpush1.msra.mxu0 0.0
  %499 = vmatprep.subr.mxu0 0.0
  %500 = vmatpush1.msra.mxu0 0.0
  %501 = vmatprep.subr.mxu0 0.0
  %502 = vmatpush1.msra.mxu0 0.0
  %503 = vmatprep.subr.mxu0 0.0
  %504 = vmatpush1.msra.mxu0 0.0
  %505 = vmatprep.subr.mxu0 0.0
  %506 = vmatpush1.msra.mxu0 0.0
  %507 = vmatprep.subr.mxu0 0.0
  %508 = vmatpush1.msra.mxu0 0.0
  %509 = vmatprep.subr.mxu0 0.0
  %510 = vmatpush1.msra.mxu0 0.0
  %511 = vmatprep.subr.mxu0 0.0
  %512 = vmatpush1.msra.mxu0 0.0
  %513 = vmatprep.subr.mxu0 0.0
  %514 = vmatpush1.msra.mxu0 0.0
  %515 = vmatprep.subr.mxu0 0.0
  %516 = vmatpush1.msra.mxu0 0.0
  %517 = vmatprep.subr.mxu0 0.0
  %518 = vmatpush1.msra.mxu0 0.0
  %519 = vmatprep.subr.mxu0 0.0
  %520 = vmatpush1.msra.mxu0 0.0
  %521 = vmatprep.subr.mxu0 0.0
  %522 = vmatpush1.msra.mxu0 %v473
  %523 = vmatprep.subr.mxu0 0.0
  %524 = vmatpush2.msra.mxu0 0.0
  %525 = vmatprep.subr.mxu0 0.0
  %526 = vmatpush2.msra.mxu0 0.0
  %527 = vmatprep.subr.mxu0 0.0
  %528 = vmatpush2.msra.mxu0 0.0
  %529 = vmatprep.subr.mxu0 0.0
  %530 = vmatpush2.msra.mxu0 0.0
  %531 = vmatprep.subr.mxu0 0.0
  %532 = vmatpush2.msra.mxu0 0.0
  %533 = vmatprep.subr.mxu0 0.0
  %534 = vmatpush2.msra.mxu0 0.0
  %535 = vmatprep.subr.mxu0 0.0
  %536 = vmatpush2.msra.mxu0 0.0
  %537 = vmatprep.subr.mxu0 0.0
  %538 = vmatpush2.msra.mxu0 0.0
  %539 = vmatprep.subr.mxu0 0.0
  %540 = vmatpush2.msra.mxu0 0.0
  %541 = vmatprep.subr.mxu0 0.0
  %542 = vmatpush2.msra.mxu0 0.0
  %543 = vmatprep.subr.mxu0 0.0
  %544 = vmatpush2.msra.mxu0 0.0
  %545 = vmatprep.subr.mxu0 0.0
  %546 = vmatpush2.msra.mxu0 0.0
  %547 = vmatprep.subr.mxu0 0.0
  %548 = vmatpush2.msra.mxu0 0.0
  %549 = vmatprep.subr.mxu0 0.0
  %550 = vmatpush2.msra.mxu0 0.0
  %551 = vmatprep.subr.mxu0 0.0
  %552 = vmatpush2.msra.mxu0 0.0
  %553 = vmatprep.subr.mxu0 0.0
  %554 = vmatpush2.msra.mxu0 0.0
  %555 = vmatprep.mubr.f32.mxu0 0.0
  %556 = vmatmul.mubr.f32.gmra.mxu0 %v480
  %v557 = vpop.f32.mrf.mxu0
  %v558 = vadd.f32 %v478, %v557
  %v559 = vpop.f32.mrf.mxu0
  %560 = vmatprep.mubr.f32.mxu0 0.0
  %561 = vmatmul.mubr.f32.gmra.mxu0 %v483
  %v562 = vpop.f32.mrf.mxu0
  %v563 = vadd.f32 %v478, %v562
  %v564 = vpop.f32.mrf.mxu0
  %565 = vmatprep.mubr.f32.mxu0 0.0
  %566 = vmatmul.mubr.f32.gmra.mxu0 %v486
  %v567 = vpop.f32.mrf.mxu0
  %v568 = vadd.f32 %v478, %v567
  %v569 = vpop.f32.mrf.mxu0
  %570 = vmatprep.mubr.f32.mxu0 0.0
  %571 = vmatmul.mubr.f32.gmra.mxu0 %v489
  %v572 = vpop.f32.mrf.mxu0
  %v573 = vadd.f32 %v478, %v572
  %v574 = vpop.f32.mrf.mxu0
  %575 = vdwg.mxu0
  %s576 = scalar_lea.vmem [#allocation2], 1
  %v577 = vld [vmem:[%s576] ss:$2 sm:$0xff]
  %s578 = scalar_lea.vmem [#allocation2], 17
  %v579 = vld [vmem:[%s578] ss:$2 sm:$0xff]
  %s580 = scalar_lea.vmem [#allocation2], 33
  %v581 = vld [vmem:[%s580] ss:$2 sm:$0xff]
  %s582 = scalar_lea.vmem [#allocation2], 49
  %v583 = vld [vmem:[%s582] ss:$2 sm:$0xff]
  %v584 = vld [vmem:[%s1 + $0x28] sm:$0xff]
  %v586 = vsel %vm11, %v577, 0
  %v589 = vsel %vm11, %v579, 0
  %v592 = vsel %vm11, %v581, 0
  %v595 = vsel %vm11, %v583, 0
  %597 = vmatprep.subr.mxu0 0.0
  %598 = vmatpush1.msra.mxu0 0.0
  %599 = vmatprep.subr.mxu0 0.0
  %600 = vmatpush1.msra.mxu0 0.0
  %601 = vmatprep.subr.mxu0 0.0
  %602 = vmatpush1.msra.mxu0 0.0
  %603 = vmatprep.subr.mxu0 0.0
  %604 = vmatpush1.msra.mxu0 0.0
  %605 = vmatprep.subr.mxu0 0.0
  %606 = vmatpush1.msra.mxu0 0.0
  %607 = vmatprep.subr.mxu0 0.0
  %608 = vmatpush1.msra.mxu0 0.0
  %609 = vmatprep.subr.mxu0 0.0
  %610 = vmatpush1.msra.mxu0 0.0
  %611 = vmatprep.subr.mxu0 0.0
  %612 = vmatpush1.msra.mxu0 0.0
  %613 = vmatprep.subr.mxu0 0.0
  %614 = vmatpush1.msra.mxu0 0.0
  %615 = vmatprep.subr.mxu0 0.0
  %616 = vmatpush1.msra.mxu0 0.0
  %617 = vmatprep.subr.mxu0 0.0
  %618 = vmatpush1.msra.mxu0 0.0
  %619 = vmatprep.subr.mxu0 0.0
  %620 = vmatpush1.msra.mxu0 0.0
  %621 = vmatprep.subr.mxu0 0.0
  %622 = vmatpush1.msra.mxu0 0.0
  %623 = vmatprep.subr.mxu0 0.0
  %624 = vmatpush1.msra.mxu0 0.0
  %625 = vmatprep.subr.mxu0 0.0
  %626 = vmatpush1.msra.mxu0 0.0
  %627 = vmatprep.subr.mxu0 0.0
  %628 = vmatpush1.msra.mxu0 %v584
  %629 = vmatprep.subr.mxu0 0.0
  %630 = vmatpush2.msra.mxu0 0.0
  %631 = vmatprep.subr.mxu0 0.0
  %632 = vmatpush2.msra.mxu0 0.0
  %633 = vmatprep.subr.mxu0 0.0
  %634 = vmatpush2.msra.mxu0 0.0
  %635 = vmatprep.subr.mxu0 0.0
  %636 = vmatpush2.msra.mxu0 0.0
  %637 = vmatprep.subr.mxu0 0.0
  %638 = vmatpush2.msra.mxu0 0.0
  %639 = vmatprep.subr.mxu0 0.0
  %640 = vmatpush2.msra.mxu0 0.0
  %641 = vmatprep.subr.mxu0 0.0
  %642 = vmatpush2.msra.mxu0 0.0
  %643 = vmatprep.subr.mxu0 0.0
  %644 = vmatpush2.msra.mxu0 0.0
  %645 = vmatprep.subr.mxu0 0.0
  %646 = vmatpush2.msra.mxu0 0.0
  %647 = vmatprep.subr.mxu0 0.0
  %648 = vmatpush2.msra.mxu0 0.0
  %649 = vmatprep.subr.mxu0 0.0
  %650 = vmatpush2.msra.mxu0 0.0
  %651 = vmatprep.subr.mxu0 0.0
  %652 = vmatpush2.msra.mxu0 0.0
  %653 = vmatprep.subr.mxu0 0.0
  %654 = vmatpush2.msra.mxu0 0.0
  %655 = vmatprep.subr.mxu0 0.0
  %656 = vmatpush2.msra.mxu0 0.0
  %657 = vmatprep.subr.mxu0 0.0
  %658 = vmatpush2.msra.mxu0 0.0
  %659 = vmatprep.subr.mxu0 0.0
  %660 = vmatpush2.msra.mxu0 0.0
  %661 = vmatprep.mubr.f32.mxu0 0.0
  %662 = vmatmul.mubr.f32.gmra.mxu0 %v586
  %v663 = vpop.f32.mrf.mxu0
  %v664 = vadd.f32 0.0, %v663
  %v665 = vpop.f32.mrf.mxu0
  %666 = vmatprep.mubr.f32.mxu0 0.0
  %667 = vmatmul.mubr.f32.gmra.mxu0 %v589
  %v668 = vpop.f32.mrf.mxu0
  %v669 = vadd.f32 0.0, %v668
  %v670 = vpop.f32.mrf.mxu0
  %671 = vmatprep.mubr.f32.mxu0 0.0
  %672 = vmatmul.mubr.f32.gmra.mxu0 %v592
  %v673 = vpop.f32.mrf.mxu0
  %v674 = vadd.f32 0.0, %v673
  %v675 = vpop.f32.mrf.mxu0
  %676 = vmatprep.mubr.f32.mxu0 0.0
  %677 = vmatmul.mubr.f32.gmra.mxu0 %v595
  %v678 = vpop.f32.mrf.mxu0
  %v679 = vadd.f32 0.0, %v678
  %v680 = vpop.f32.mrf.mxu0
  %681 = vdwg.mxu0
  %v682 = vadd.f32 %v558, %v664
  %v683 = vadd.f32 %v563, %v669
  %v684 = vadd.f32 %v568, %v674
  %v685 = vadd.f32 %v573, %v679
  %s686 = scalar_lea.vmem [#allocation2], 2
  %v687 = vld [vmem:[%s686] ss:$2 sm:$0xff]
  %s688 = scalar_lea.vmem [#allocation2], 18
  %v689 = vld [vmem:[%s688] ss:$2 sm:$0xff]
  %s690 = scalar_lea.vmem [#allocation2], 34
  %v691 = vld [vmem:[%s690] ss:$2 sm:$0xff]
  %s692 = scalar_lea.vmem [#allocation2], 50
  %v693 = vld [vmem:[%s692] ss:$2 sm:$0xff]
  %v694 = vld [vmem:[%s1 + $0x30] sm:$0xff]
  %v696 = vsel %vm11, %v687, 0
  %v699 = vsel %vm11, %v689, 0
  %v702 = vsel %vm11, %v691, 0
  %v705 = vsel %vm11, %v693, 0
  %707 = vmatprep.subr.mxu0 0.0
  %708 = vmatpush1.msra.mxu0 0.0
  %709 = vmatprep.subr.mxu0 0.0
  %710 = vmatpush1.msra.mxu0 0.0
  %711 = vmatprep.subr.mxu0 0.0
  %712 = vmatpush1.msra.mxu0 0.0
  %713 = vmatprep.subr.mxu0 0.0
  %714 = vmatpush1.msra.mxu0 0.0
  %715 = vmatprep.subr.mxu0 0.0
  %716 = vmatpush1.msra.mxu0 0.0
  %717 = vmatprep.subr.mxu0 0.0
  %718 = vmatpush1.msra.mxu0 0.0
  %719 = vmatprep.subr.mxu0 0.0
  %720 = vmatpush1.msra.mxu0 0.0
  %721 = vmatprep.subr.mxu0 0.0
  %722 = vmatpush1.msra.mxu0 0.0
  %723 = vmatprep.subr.mxu0 0.0
  %724 = vmatpush1.msra.mxu0 0.0
  %725 = vmatprep.subr.mxu0 0.0
  %726 = vmatpush1.msra.mxu0 0.0
  %727 = vmatprep.subr.mxu0 0.0
  %728 = vmatpush1.msra.mxu0 0.0
  %729 = vmatprep.subr.mxu0 0.0
  %730 = vmatpush1.msra.mxu0 0.0
  %731 = vmatprep.subr.mxu0 0.0
  %732 = vmatpush1.msra.mxu0 0.0
  %733 = vmatprep.subr.mxu0 0.0
  %734 = vmatpush1.msra.mxu0 0.0
  %735 = vmatprep.subr.mxu0 0.0
  %736 = vmatpush1.msra.mxu0 0.0
  %737 = vmatprep.subr.mxu0 0.0
  %738 = vmatpush1.msra.mxu0 %v694
  %739 = vmatprep.subr.mxu0 0.0
  %740 = vmatpush2.msra.mxu0 0.0
  %741 = vmatprep.subr.mxu0 0.0
  %742 = vmatpush2.msra.mxu0 0.0
  %743 = vmatprep.subr.mxu0 0.0
  %744 = vmatpush2.msra.mxu0 0.0
  %745 = vmatprep.subr.mxu0 0.0
  %746 = vmatpush2.msra.mxu0 0.0
  %747 = vmatprep.subr.mxu0 0.0
  %748 = vmatpush2.msra.mxu0 0.0
  %749 = vmatprep.subr.mxu0 0.0
  %750 = vmatpush2.msra.mxu0 0.0
  %751 = vmatprep.subr.mxu0 0.0
  %752 = vmatpush2.msra.mxu0 0.0
  %753 = vmatprep.subr.mxu0 0.0
  %754 = vmatpush2.msra.mxu0 0.0
  %755 = vmatprep.subr.mxu0 0.0
  %756 = vmatpush2.msra.mxu0 0.0
  %757 = vmatprep.subr.mxu0 0.0
  %758 = vmatpush2.msra.mxu0 0.0
  %759 = vmatprep.subr.mxu0 0.0
  %760 = vmatpush2.msra.mxu0 0.0
  %761 = vmatprep.subr.mxu0 0.0
  %762 = vmatpush2.msra.mxu0 0.0
  %763 = vmatprep.subr.mxu0 0.0
  %764 = vmatpush2.msra.mxu0 0.0
  %765 = vmatprep.subr.mxu0 0.0
  %766 = vmatpush2.msra.mxu0 0.0
  %767 = vmatprep.subr.mxu0 0.0
  %768 = vmatpush2.msra.mxu0 0.0
  %769 = vmatprep.subr.mxu0 0.0
  %770 = vmatpush2.msra.mxu0 0.0
  %771 = vmatprep.mubr.f32.mxu0 0.0
  %772 = vmatmul.mubr.f32.gmra.mxu0 %v696
  %v773 = vpop.f32.mrf.mxu0
  %v774 = vadd.f32 0.0, %v773
  %v775 = vpop.f32.mrf.mxu0
  %776 = vmatprep.mubr.f32.mxu0 0.0
  %777 = vmatmul.mubr.f32.gmra.mxu0 %v699
  %v778 = vpop.f32.mrf.mxu0
  %v779 = vadd.f32 0.0, %v778
  %v780 = vpop.f32.mrf.mxu0
  %781 = vmatprep.mubr.f32.mxu0 0.0
  %782 = vmatmul.mubr.f32.gmra.mxu0 %v702
  %v783 = vpop.f32.mrf.mxu0
  %v784 = vadd.f32 0.0, %v783
  %v785 = vpop.f32.mrf.mxu0
  %786 = vmatprep.mubr.f32.mxu0 0.0
  %787 = vmatmul.mubr.f32.gmra.mxu0 %v705
  %v788 = vpop.f32.mrf.mxu0
  %v789 = vadd.f32 0.0, %v788
  %v790 = vpop.f32.mrf.mxu0
  %791 = vdwg.mxu0
  %v792 = vadd.f32 %v682, %v774
  %v793 = vadd.f32 %v683, %v779
  %v794 = vadd.f32 %v684, %v784
  %v795 = vadd.f32 %v685, %v789
  %v796 = vmax.f32 %v792, 0.0
  %v797 = vmax.f32 %v793, 0.0
  %v798 = vmax.f32 %v794, 0.0
  %v799 = vmax.f32 %v795, 0.0
  %800 = vst.msk [vmem:[#allocation3] sm:$0xff] %vm13, %v796
  %801 = vst.msk [vmem:[#allocation3 + $0x8] sm:$0xff] %vm13, %v797
  %802 = vst.msk [vmem:[#allocation3 + $0x10] sm:$0xff] %vm13, %v798
  %803 = vst.msk [vmem:[#allocation3 + $0x18] sm:$0xff] %vm13, %v799
  %v804 = vld [vmem:[#allocation3] ss:$2 sm:$0xff]
  %s805 = scalar_lea.vmem [#allocation3], 16
  %v806 = vld [vmem:[%s805] ss:$2 sm:$0xff]
  %v807 = vld [vmem:[%s1 + $0x40] sm:$0xff]
  %v808 = vld [vmem:[%s1 + $0x48] sm:$0xff]
  %v809 = vld [vmem:[%s1 + $0x70] sm:$0x1]
  %v810 = vlaneseq
  %v811 = vshrl.u32 %v810, 7
  %v812 = vsub.s32 0, %v811
  %v813 = vrot.slane %v809, %v812
  %v815 = vsel %vm13, %v804, 0
  %v818 = vsel %vm13, %v806, 0
  %820 = vmatprep.subr.mxu0 0.0
  %821 = vmatpush1.msra.mxu0 0.0
  %822 = vmatprep.subr.mxu0 0.0
  %823 = vmatpush1.msra.mxu0 0.0
  %824 = vmatprep.subr.mxu0 0.0
  %825 = vmatpush1.msra.mxu0 0.0
  %826 = vmatprep.subr.mxu0 0.0
  %827 = vmatpush1.msra.mxu0 0.0
  %828 = vmatprep.subr.mxu0 0.0
  %829 = vmatpush1.msra.mxu0 0.0
  %830 = vmatprep.subr.mxu0 0.0
  %831 = vmatpush1.msra.mxu0 0.0
  %832 = vmatprep.subr.mxu0 0.0
  %833 = vmatpush1.msra.mxu0 0.0
  %834 = vmatprep.subr.mxu0 0.0
  %835 = vmatpush1.msra.mxu0 0.0
  %836 = vmatprep.subr.mxu0 0.0
  %837 = vmatpush1.msra.mxu0 0.0
  %838 = vmatprep.subr.mxu0 0.0
  %839 = vmatpush1.msra.mxu0 0.0
  %840 = vmatprep.subr.mxu0 0.0
  %841 = vmatpush1.msra.mxu0 0.0
  %842 = vmatprep.subr.mxu0 0.0
  %843 = vmatpush1.msra.mxu0 0.0
  %844 = vmatprep.subr.mxu0 0.0
  %845 = vmatpush1.msra.mxu0 0.0
  %846 = vmatprep.subr.mxu0 0.0
  %847 = vmatpush1.msra.mxu0 0.0
  %848 = vmatprep.subr.mxu0 0.0
  %849 = vmatpush1.msra.mxu0 %v808
  %850 = vmatprep.subr.mxu0 0.0
  %851 = vmatpush1.msra.mxu0 %v807
  %852 = vmatprep.subr.mxu0 0.0
  %853 = vmatpush2.msra.mxu0 0.0
  %854 = vmatprep.subr.mxu0 0.0
  %855 = vmatpush2.msra.mxu0 0.0
  %856 = vmatprep.subr.mxu0 0.0
  %857 = vmatpush2.msra.mxu0 0.0
  %858 = vmatprep.subr.mxu0 0.0
  %859 = vmatpush2.msra.mxu0 0.0
  %860 = vmatprep.subr.mxu0 0.0
  %861 = vmatpush2.msra.mxu0 0.0
  %862 = vmatprep.subr.mxu0 0.0
  %863 = vmatpush2.msra.mxu0 0.0
  %864 = vmatprep.subr.mxu0 0.0
  %865 = vmatpush2.msra.mxu0 0.0
  %866 = vmatprep.subr.mxu0 0.0
  %867 = vmatpush2.msra.mxu0 0.0
  %868 = vmatprep.subr.mxu0 0.0
  %869 = vmatpush2.msra.mxu0 0.0
  %870 = vmatprep.subr.mxu0 0.0
  %871 = vmatpush2.msra.mxu0 0.0
  %872 = vmatprep.subr.mxu0 0.0
  %873 = vmatpush2.msra.mxu0 0.0
  %874 = vmatprep.subr.mxu0 0.0
  %875 = vmatpush2.msra.mxu0 0.0
  %876 = vmatprep.subr.mxu0 0.0
  %877 = vmatpush2.msra.mxu0 0.0
  %878 = vmatprep.subr.mxu0 0.0
  %879 = vmatpush2.msra.mxu0 0.0
  %880 = vmatprep.subr.mxu0 0.0
  %881 = vmatpush2.msra.mxu0 0.0
  %882 = vmatprep.subr.mxu0 0.0
  %883 = vmatpush2.msra.mxu0 0.0
  %884 = vmatprep.mubr.f32.mxu0 0.0
  %885 = vmatmul.mubr.f32.gmra.mxu0 %v815
  %v886 = vpop.f32.mrf.mxu0
  %v887 = vadd.f32 %v813, %v886
  %v888 = vpop.f32.mrf.mxu0
  %889 = vmatprep.mubr.f32.mxu0 0.0
  %890 = vmatmul.mubr.f32.gmra.mxu0 %v818
  %v891 = vpop.f32.mrf.mxu0
  %v892 = vadd.f32 %v813, %v891
  %v893 = vpop.f32.mrf.mxu0
  %894 = vdwg.mxu0
  %s895 = scalar_lea.vmem [#allocation3], 1
  %v896 = vld [vmem:[%s895] ss:$2 sm:$0xff]
  %s897 = scalar_lea.vmem [#allocation3], 17
  %v898 = vld [vmem:[%s897] ss:$2 sm:$0xff]
  %v899 = vld [vmem:[%s1 + $0x50] sm:$0xff]
  %v900 = vld [vmem:[%s1 + $0x58] sm:$0xff]
  %v902 = vsel %vm13, %v896, 0
  %v905 = vsel %vm13, %v898, 0
  %907 = vmatprep.subr.mxu0 0.0
  %908 = vmatpush1.msra.mxu0 0.0
  %909 = vmatprep.subr.mxu0 0.0
  %910 = vmatpush1.msra.mxu0 0.0
  %911 = vmatprep.subr.mxu0 0.0
  %912 = vmatpush1.msra.mxu0 0.0
  %913 = vmatprep.subr.mxu0 0.0
  %914 = vmatpush1.msra.mxu0 0.0
  %915 = vmatprep.subr.mxu0 0.0
  %916 = vmatpush1.msra.mxu0 0.0
  %917 = vmatprep.subr.mxu0 0.0
  %918 = vmatpush1.msra.mxu0 0.0
  %919 = vmatprep.subr.mxu0 0.0
  %920 = vmatpush1.msra.mxu0 0.0
  %921 = vmatprep.subr.mxu0 0.0
  %922 = vmatpush1.msra.mxu0 0.0
  %923 = vmatprep.subr.mxu0 0.0
  %924 = vmatpush1.msra.mxu0 0.0
  %925 = vmatprep.subr.mxu0 0.0
  %926 = vmatpush1.msra.mxu0 0.0
  %927 = vmatprep.subr.mxu0 0.0
  %928 = vmatpush1.msra.mxu0 0.0
  %929 = vmatprep.subr.mxu0 0.0
  %930 = vmatpush1.msra.mxu0 0.0
  %931 = vmatprep.subr.mxu0 0.0
  %932 = vmatpush1.msra.mxu0 0.0
  %933 = vmatprep.subr.mxu0 0.0
  %934 = vmatpush1.msra.mxu0 0.0
  %935 = vmatprep.subr.mxu0 0.0
  %936 = vmatpush1.msra.mxu0 %v900
  %937 = vmatprep.subr.mxu0 0.0
  %938 = vmatpush1.msra.mxu0 %v899
  %939 = vmatprep.subr.mxu0 0.0
  %940 = vmatpush2.msra.mxu0 0.0
  %941 = vmatprep.subr.mxu0 0.0
  %942 = vmatpush2.msra.mxu0 0.0
  %943 = vmatprep.subr.mxu0 0.0
  %944 = vmatpush2.msra.mxu0 0.0
  %945 = vmatprep.subr.mxu0 0.0
  %946 = vmatpush2.msra.mxu0 0.0
  %947 = vmatprep.subr.mxu0 0.0
  %948 = vmatpush2.msra.mxu0 0.0
  %949 = vmatprep.subr.mxu0 0.0
  %950 = vmatpush2.msra.mxu0 0.0
  %951 = vmatprep.subr.mxu0 0.0
  %952 = vmatpush2.msra.mxu0 0.0
  %953 = vmatprep.subr.mxu0 0.0
  %954 = vmatpush2.msra.mxu0 0.0
  %955 = vmatprep.subr.mxu0 0.0
  %956 = vmatpush2.msra.mxu0 0.0
  %957 = vmatprep.subr.mxu0 0.0
  %958 = vmatpush2.msra.mxu0 0.0
  %959 = vmatprep.subr.mxu0 0.0
  %960 = vmatpush2.msra.mxu0 0.0
  %961 = vmatprep.subr.mxu0 0.0
  %962 = vmatpush2.msra.mxu0 0.0
  %963 = vmatprep.subr.mxu0 0.0
  %964 = vmatpush2.msra.mxu0 0.0
  %965 = vmatprep.subr.mxu0 0.0
  %966 = vmatpush2.msra.mxu0 0.0
  %967 = vmatprep.subr.mxu0 0.0
  %968 = vmatpush2.msra.mxu0 0.0
  %969 = vmatprep.subr.mxu0 0.0
  %970 = vmatpush2.msra.mxu0 0.0
  %971 = vmatprep.mubr.f32.mxu0 0.0
  %972 = vmatmul.mubr.f32.gmra.mxu0 %v902
  %v973 = vpop.f32.mrf.mxu0
  %v974 = vadd.f32 0.0, %v973
  %v975 = vpop.f32.mrf.mxu0
  %976 = vmatprep.mubr.f32.mxu0 0.0
  %977 = vmatmul.mubr.f32.gmra.mxu0 %v905
  %v978 = vpop.f32.mrf.mxu0
  %v979 = vadd.f32 0.0, %v978
  %v980 = vpop.f32.mrf.mxu0
  %981 = vdwg.mxu0
  %v982 = vadd.f32 %v887, %v974
  %v983 = vadd.f32 %v892, %v979
  %s984 = scalar_lea.vmem [#allocation3], 2
  %v985 = vld [vmem:[%s984] ss:$2 sm:$0xff]
  %s986 = scalar_lea.vmem [#allocation3], 18
  %v987 = vld [vmem:[%s986] ss:$2 sm:$0xff]
  %v988 = vld [vmem:[%s1 + $0x60] sm:$0xff]
  %v989 = vld [vmem:[%s1 + $0x68] sm:$0xff]
  %v991 = vsel %vm13, %v985, 0
  %v994 = vsel %vm13, %v987, 0
  %996 = vmatprep.subr.mxu0 0.0
  %997 = vmatpush1.msra.mxu0 0.0
  %998 = vmatprep.subr.mxu0 0.0
  %999 = vmatpush1.msra.mxu0 0.0
  %1000 = vmatprep.subr.mxu0 0.0
  %1001 = vmatpush1.msra.mxu0 0.0
  %1002 = vmatprep.subr.mxu0 0.0
  %1003 = vmatpush1.msra.mxu0 0.0
  %1004 = vmatprep.subr.mxu0 0.0
  %1005 = vmatpush1.msra.mxu0 0.0
  %1006 = vmatprep.subr.mxu0 0.0
  %1007 = vmatpush1.msra.mxu0 0.0
  %1008 = vmatprep.subr.mxu0 0.0
  %1009 = vmatpush1.msra.mxu0 0.0
  %1010 = vmatprep.subr.mxu0 0.0
  %1011 = vmatpush1.msra.mxu0 0.0
  %1012 = vmatprep.subr.mxu0 0.0
  %1013 = vmatpush1.msra.mxu0 0.0
  %1014 = vmatprep.subr.mxu0 0.0
  %1015 = vmatpush1.msra.mxu0 0.0
  %1016 = vmatprep.subr.mxu0 0.0
  %1017 = vmatpush1.msra.mxu0 0.0
  %1018 = vmatprep.subr.mxu0 0.0
  %1019 = vmatpush1.msra.mxu0 0.0
  %1020 = vmatprep.subr.mxu0 0.0
  %1021 = vmatpush1.msra.mxu0 0.0
  %1022 = vmatprep.subr.mxu0 0.0
  %1023 = vmatpush1.msra.mxu0 0.0
  %1024 = vmatprep.subr.mxu0 0.0
  %1025 = vmatpush1.msra.mxu0 %v989
  %1026 = vmatprep.subr.mxu0 0.0
  %1027 = vmatpush1.msra.mxu0 %v988
  %1028 = vmatprep.subr.mxu0 0.0
  %1029 = vmatpush2.msra.mxu0 0.0
  %1030 = vmatprep.subr.mxu0 0.0
  %1031 = vmatpush2.msra.mxu0 0.0
  %1032 = vmatprep.subr.mxu0 0.0
  %1033 = vmatpush2.msra.mxu0 0.0
  %1034 = vmatprep.subr.mxu0 0.0
  %1035 = vmatpush2.msra.mxu0 0.0
  %1036 = vmatprep.subr.mxu0 0.0
  %1037 = vmatpush2.msra.mxu0 0.0
  %1038 = vmatprep.subr.mxu0 0.0
  %1039 = vmatpush2.msra.mxu0 0.0
  %1040 = vmatprep.subr.mxu0 0.0
  %1041 = vmatpush2.msra.mxu0 0.0
  %1042 = vmatprep.subr.mxu0 0.0
  %1043 = vmatpush2.msra.mxu0 0.0
  %1044 = vmatprep.subr.mxu0 0.0
  %1045 = vmatpush2.msra.mxu0 0.0
  %1046 = vmatprep.subr.mxu0 0.0
  %1047 = vmatpush2.msra.mxu0 0.0
  %1048 = vmatprep.subr.mxu0 0.0
  %1049 = vmatpush2.msra.mxu0 0.0
  %1050 = vmatprep.subr.mxu0 0.0
  %1051 = vmatpush2.msra.mxu0 0.0
  %1052 = vmatprep.subr.mxu0 0.0
  %1053 = vmatpush2.msra.mxu0 0.0
  %1054 = vmatprep.subr.mxu0 0.0
  %1055 = vmatpush2.msra.mxu0 0.0
  %1056 = vmatprep.subr.mxu0 0.0
  %1057 = vmatpush2.msra.mxu0 0.0
  %1058 = vmatprep.subr.mxu0 0.0
  %1059 = vmatpush2.msra.mxu0 0.0
  %1060 = vmatprep.mubr.f32.mxu0 0.0
  %1061 = vmatmul.mubr.f32.gmra.mxu0 %v991
  %v1062 = vpop.f32.mrf.mxu0
  %v1063 = vadd.f32 0.0, %v1062
  %v1064 = vpop.f32.mrf.mxu0
  %1065 = vmatprep.mubr.f32.mxu0 0.0
  %1066 = vmatmul.mubr.f32.gmra.mxu0 %v994
  %v1067 = vpop.f32.mrf.mxu0
  %v1068 = vadd.f32 0.0, %v1067
  %v1069 = vpop.f32.mrf.mxu0
  %1070 = vdwg.mxu0
  %v1071 = vadd.f32 %v982, %v1063
  %v1072 = vadd.f32 %v983, %v1068
  %v1073 = vmax.f32 %v1071, 0.0
  %v1074 = vmax.f32 %v1072, 0.0
  %vm1075 = vcmask 261120
  %1076 = vst.msk [vmem:[#allocation4] sm:$0xff] %vm1075, %v1073
  %1077 = vst.msk [vmem:[#allocation4 + $0x8] sm:$0xff] %vm1075, %v1074
  %v1078 = vld [vmem:[#allocation4] ss:$8 sm:$0x3]
  %vm1079 = vcmask 254976
  %1080 = vst.msk [vmem:[#allocation5] sm:$0x3] %vm1079, %v1078
  %s1081 = scalar_lea.vmem [#allocation4], 1
  %v1082 = vld [vmem:[%s1081] ss:$8 sm:$0x3]
  %v1085 = vunpack.c.l.s4 1983009808
  %v1086 = vunpack.c.0.s8 %v1085
  %v1087 = vlaneseq
  %v1088 = vshrl.u32 %v1087, 7
  %v1089 = vsub.s32 %v1086, %v1088
  %v1090 = vrot.slane %v1082, %v1089
  %1091 = vrot.lane.b32.xlu0 %v1090, 32
  %v1092 = vpop.permute.xlu0 %1091
  %vm1094 = vcmask 517376
  %1095 = vst.msk [vmem:[#allocation5] sm:$0x3] %vm1094, %v1092
  %s1096 = scalar_lea.vmem [#allocation4], 2
  %v1097 = vld [vmem:[%s1096] ss:$8 sm:$0x3]
  %v1100 = vunpack.c.l.s4 1983009808
  %v1101 = vunpack.c.0.s8 %v1100
  %v1102 = vlaneseq
  %v1103 = vshrl.u32 %v1102, 7
  %v1104 = vsub.s32 %v1101, %v1103
  %v1105 = vrot.slane %v1097, %v1104
  %1106 = vrot.lane.b32.xlu0 %v1105, 64
  %v1107 = vpop.permute.xlu0 %1106
  %vm1109 = vcmask 779776
  %1110 = vst.msk [vmem:[#allocation5] sm:$0x3] %vm1109, %v1107
  %s1111 = scalar_lea.vmem [#allocation4], 3
  %v1112 = vld [vmem:[%s1111] ss:$8 sm:$0x3]
  %v1115 = vunpack.c.l.s4 1983009808
  %v1116 = vunpack.c.0.s8 %v1115
  %v1117 = vlaneseq
  %v1118 = vshrl.u32 %v1117, 7
  %v1119 = vsub.s32 %v1116, %v1118
  %v1120 = vrot.slane %v1112, %v1119
  %1121 = vrot.lane.b32.xlu0 %v1120, 96
  %v1122 = vpop.permute.xlu0 %1121
  %vm1124 = vcmask 1042176
  %1125 = vst.msk [vmem:[#allocation5] sm:$0x3] %vm1124, %v1122
  %s1126 = scalar_lea.vmem [#allocation4], 4
  %v1127 = vld [vmem:[%s1126] ss:$8 sm:$0x3]
  %1128 = vst.msk [vmem:[#allocation5 + $0x2] sm:$0x3] %vm1079, %v1127
  %s1129 = scalar_lea.vmem [#allocation4], 5
  %v1130 = vld [vmem:[%s1129] ss:$8 sm:$0x3]
  %v1133 = vunpack.c.l.s4 1983009808
  %v1134 = vunpack.c.0.s8 %v1133
  %v1135 = vlaneseq
  %v1136 = vshrl.u32 %v1135, 7
  %v1137 = vsub.s32 %v1134, %v1136
  %v1138 = vrot.slane %v1130, %v1137
  %1139 = vrot.lane.b32.xlu0 %v1138, 32
  %v1140 = vpop.permute.xlu0 %1139
  %1142 = vst.msk [vmem:[#allocation5 + $0x2] sm:$0x3] %vm1094, %v1140
  %v1143 = vld [vmem:[#allocation5] sm:$0xf]
  %v1144 = vld [vmem:[%s1 + $0x78] sm:$0xff]
  %v1145 = vld [vmem:[%s1 + $0x80] sm:$0xff]
  %v1146 = vld [vmem:[%s1 + $0x88] sm:$0xff]
  %v1147 = vld [vmem:[%s1 + $0x90] sm:$0xff]
  %v1148 = vld [vmem:[%s1 + $0x98] sm:$0xff]
  %v1149 = vld [vmem:[%s1 + $0xa0] sm:$0xff]
  %v1150 = vld [vmem:[%s1 + $0xa8] sm:$0xff]
  %v1151 = vld [vmem:[%s1 + $0xb0] sm:$0xff]
  %v1152 = vld [vmem:[%s1 + $0xb8] sm:$0xff]
  %v1153 = vld [vmem:[%s1 + $0xc0] sm:$0xff]
  %v1154 = vld [vmem:[%s1 + $0xc8] sm:$0xff]
  %v1155 = vld [vmem:[%s1 + $0xd0] sm:$0xff]
  %v1156 = vld [vmem:[%s1 + $0xd8] sm:$0xff]
  %v1157 = vld [vmem:[%s1 + $0xe0] sm:$0xff]
  %v1158 = vld [vmem:[%s1 + $0xe8] sm:$0xff]
  %v1159 = vld [vmem:[%s1 + $0xf0] sm:$0xff]
  %v1160 = vld [vmem:[%s1 + $0xf8] sm:$0xff]
  %v1161 = vld [vmem:[%s1 + $0x100] sm:$0xff]
  %v1162 = vld [vmem:[%s1 + $0x108] sm:$0xff]
  %v1163 = vld [vmem:[%s1 + $0x110] sm:$0xff]
  %v1164 = vld [vmem:[%s1 + $0x118] sm:$0xff]
  %v1165 = vld [vmem:[%s1 + $0x120] sm:$0xff]
  %v1166 = vld [vmem:[%s1 + $0x128] sm:$0xff]
  %v1167 = vld [vmem:[%s1 + $0x130] sm:$0xff]
  %v1168 = vld [vmem:[%s1 + $0x138] sm:$0x1]
  %v1169 = vlaneseq
  %v1170 = vshrl.u32 %v1169, 7
  %v1171 = vsub.s32 0, %v1170
  %v1172 = vrot.slane %v1168, %v1171
  %v1175 = vunpack.c.l.s4 1983009808
  %v1176 = vunpack.c.0.s8 %v1175
  %v1177 = vlaneseq
  %v1178 = vshrl.u32 %v1177, 7
  %v1179 = vsub.s32 %v1176, %v1178
  %v1180 = vrot.slane %v1143, %v1179
  %v1181 = vcombine.high %v1180, %v1180
  %vm1183 = vcmask 523264
  %v1184 = vsel %vm1183, %v1181, 0
  %1186 = vmatprep.subr.mxu0 0.0
  %1187 = vmatpush1.msra.mxu0 %v1159
  %1188 = vmatprep.subr.mxu0 0.0
  %1189 = vmatpush1.msra.mxu0 %v1158
  %1190 = vmatprep.subr.mxu0 0.0
  %1191 = vmatpush1.msra.mxu0 %v1157
  %1192 = vmatprep.subr.mxu0 0.0
  %1193 = vmatpush1.msra.mxu0 %v1156
  %1194 = vmatprep.subr.mxu0 0.0
  %1195 = vmatpush1.msra.mxu0 %v1155
  %1196 = vmatprep.subr.mxu0 0.0
  %1197 = vmatpush1.msra.mxu0 %v1154
  %1198 = vmatprep.subr.mxu0 0.0
  %1199 = vmatpush1.msra.mxu0 %v1153
  %1200 = vmatprep.subr.mxu0 0.0
  %1201 = vmatpush1.msra.mxu0 %v1152
  %1202 = vmatprep.subr.mxu0 0.0
  %1203 = vmatpush1.msra.mxu0 %v1151
  %1204 = vmatprep.subr.mxu0 0.0
  %1205 = vmatpush1.msra.mxu0 %v1150
  %1206 = vmatprep.subr.mxu0 0.0
  %1207 = vmatpush1.msra.mxu0 %v1149
  %1208 = vmatprep.subr.mxu0 0.0
  %1209 = vmatpush1.msra.mxu0 %v1148
  %1210 = vmatprep.subr.mxu0 0.0
  %1211 = vmatpush1.msra.mxu0 %v1147
  %1212 = vmatprep.subr.mxu0 0.0
  %1213 = vmatpush1.msra.mxu0 %v1146
  %1214 = vmatprep.subr.mxu0 0.0
  %1215 = vmatpush1.msra.mxu0 %v1145
  %1216 = vmatprep.subr.mxu0 0.0
  %1217 = vmatpush1.msra.mxu0 %v1144
  %1218 = vmatprep.subr.mxu0 0.0
  %1219 = vmatpush2.msra.mxu0 0.0
  %1220 = vmatprep.subr.mxu0 0.0
  %1221 = vmatpush2.msra.mxu0 0.0
  %1222 = vmatprep.subr.mxu0 0.0
  %1223 = vmatpush2.msra.mxu0 0.0
  %1224 = vmatprep.subr.mxu0 0.0
  %1225 = vmatpush2.msra.mxu0 0.0
  %1226 = vmatprep.subr.mxu0 0.0
  %1227 = vmatpush2.msra.mxu0 0.0
  %1228 = vmatprep.subr.mxu0 0.0
  %1229 = vmatpush2.msra.mxu0 0.0
  %1230 = vmatprep.subr.mxu0 0.0
  %1231 = vmatpush2.msra.mxu0 0.0
  %1232 = vmatprep.subr.mxu0 0.0
  %1233 = vmatpush2.msra.mxu0 0.0
  %1234 = vmatprep.subr.mxu0 0.0
  %1235 = vmatpush2.msra.mxu0 %v1167
  %1236 = vmatprep.subr.mxu0 0.0
  %1237 = vmatpush2.msra.mxu0 %v1166
  %1238 = vmatprep.subr.mxu0 0.0
  %1239 = vmatpush2.msra.mxu0 %v1165
  %1240 = vmatprep.subr.mxu0 0.0
  %1241 = vmatpush2.msra.mxu0 %v1164
  %1242 = vmatprep.subr.mxu0 0.0
  %1243 = vmatpush2.msra.mxu0 %v1163
  %1244 = vmatprep.subr.mxu0 0.0
  %1245 = vmatpush2.msra.mxu0 %v1162
  %1246 = vmatprep.subr.mxu0 0.0
  %1247 = vmatpush2.msra.mxu0 %v1161
  %1248 = vmatprep.subr.mxu0 0.0
  %1249 = vmatpush2.msra.mxu0 %v1160
  %1250 = vmatprep.mubr.f32.mxu0 %v1184
  %1251 = vmatmul.mubr.f32.gmra.mxu0 %v1180
  %v1252 = vpop.f32.mrf.mxu0
  %v1253 = vadd.f32 %v1172, %v1252
  %v1254 = vpop.f32.mrf.mxu0
  %1255 = vdwg.mxu0
  %v1256 = vmax.f32 %v1253, 0.0
  %v1257 = vld [vmem:[%s1 + $0x140] sm:$0xff]
  %v1258 = vld [vmem:[%s1 + $0x148] sm:$0xff]
  %v1259 = vld [vmem:[%s1 + $0x150] sm:$0xff]
  %v1260 = vld [vmem:[%s1 + $0x158] sm:$0xff]
  %v1261 = vld [vmem:[%s1 + $0x160] sm:$0xff]
  %v1262 = vld [vmem:[%s1 + $0x168] sm:$0xff]
  %v1263 = vld [vmem:[%s1 + $0x170] sm:$0xff]
  %v1264 = vld [vmem:[%s1 + $0x178] sm:$0xff]
  %v1265 = vld [vmem:[%s1 + $0x180] sm:$0xff]
  %v1266 = vld [vmem:[%s1 + $0x188] sm:$0xff]
  %v1267 = vld [vmem:[%s1 + $0x190] sm:$0xff]
  %v1268 = vld [vmem:[%s1 + $0x198] sm:$0xff]
  %v1269 = vld [vmem:[%s1 + $0x1a0] sm:$0x1]
  %v1270 = vlaneseq
  %v1271 = vshrl.u32 %v1270, 7
  %v1272 = vsub.s32 0, %v1271
  %v1273 = vrot.slane %v1269, %v1272
  %vm1274 = vcmask 785408
  %v1276 = vsel %vm1274, %v1256, 0
  %1278 = vmatprep.subr.mxu0 0.0
  %1279 = vmatpush1.msra.mxu0 0.0
  %1280 = vmatprep.subr.mxu0 0.0
  %1281 = vmatpush1.msra.mxu0 0.0
  %1282 = vmatprep.subr.mxu0 0.0
  %1283 = vmatpush1.msra.mxu0 0.0
  %1284 = vmatprep.subr.mxu0 0.0
  %1285 = vmatpush1.msra.mxu0 0.0
  %1286 = vmatprep.subr.mxu0 0.0
  %1287 = vmatpush1.msra.mxu0 %v1268
  %1288 = vmatprep.subr.mxu0 0.0
  %1289 = vmatpush1.msra.mxu0 %v1267
  %1290 = vmatprep.subr.mxu0 0.0
  %1291 = vmatpush1.msra.mxu0 %v1266
  %1292 = vmatprep.subr.mxu0 0.0
  %1293 = vmatpush1.msra.mxu0 %v1265
  %1294 = vmatprep.subr.mxu0 0.0
  %1295 = vmatpush1.msra.mxu0 %v1264
  %1296 = vmatprep.subr.mxu0 0.0
  %1297 = vmatpush1.msra.mxu0 %v1263
  %1298 = vmatprep.subr.mxu0 0.0
  %1299 = vmatpush1.msra.mxu0 %v1262
  %1300 = vmatprep.subr.mxu0 0.0
  %1301 = vmatpush1.msra.mxu0 %v1261
  %1302 = vmatprep.subr.mxu0 0.0
  %1303 = vmatpush1.msra.mxu0 %v1260
  %1304 = vmatprep.subr.mxu0 0.0
  %1305 = vmatpush1.msra.mxu0 %v1259
  %1306 = vmatprep.subr.mxu0 0.0
  %1307 = vmatpush1.msra.mxu0 %v1258
  %1308 = vmatprep.subr.mxu0 0.0
  %1309 = vmatpush1.msra.mxu0 %v1257
  %1310 = vmatprep.subr.mxu0 0.0
  %1311 = vmatpush2.msra.mxu0 0.0
  %1312 = vmatprep.subr.mxu0 0.0
  %1313 = vmatpush2.msra.mxu0 0.0
  %1314 = vmatprep.subr.mxu0 0.0
  %1315 = vmatpush2.msra.mxu0 0.0
  %1316 = vmatprep.subr.mxu0 0.0
  %1317 = vmatpush2.msra.mxu0 0.0
  %1318 = vmatprep.subr.mxu0 0.0
  %1319 = vmatpush2.msra.mxu0 0.0
  %1320 = vmatprep.subr.mxu0 0.0
  %1321 = vmatpush2.msra.mxu0 0.0
  %1322 = vmatprep.subr.mxu0 0.0
  %1323 = vmatpush2.msra.mxu0 0.0
  %1324 = vmatprep.subr.mxu0 0.0
  %1325 = vmatpush2.msra.mxu0 0.0
  %1326 = vmatprep.subr.mxu0 0.0
  %1327 = vmatpush2.msra.mxu0 0.0
  %1328 = vmatprep.subr.mxu0 0.0
  %1329 = vmatpush2.msra.mxu0 0.0
  %1330 = vmatprep.subr.mxu0 0.0
  %1331 = vmatpush2.msra.mxu0 0.0
  %1332 = vmatprep.subr.mxu0 0.0
  %1333 = vmatpush2.msra.mxu0 0.0
  %1334 = vmatprep.subr.mxu0 0.0
  %1335 = vmatpush2.msra.mxu0 0.0
  %1336 = vmatprep.subr.mxu0 0.0
  %1337 = vmatpush2.msra.mxu0 0.0
  %1338 = vmatprep.subr.mxu0 0.0
  %1339 = vmatpush2.msra.mxu0 0.0
  %1340 = vmatprep.subr.mxu0 0.0
  %1341 = vmatpush2.msra.mxu0 0.0
  %1342 = vmatprep.mubr.f32.mxu0 0.0
  %1343 = vmatmul.mubr.f32.gmra.mxu0 %v1276
  %v1344 = vpop.f32.mrf.mxu0
  %v1345 = vadd.f32 %v1273, %v1344
  %v1346 = vpop.f32.mrf.mxu0
  %1347 = vdwg.mxu0
  %v1348 = vmax.f32 %v1345, 0.0
  %vm1349 = vcmask 41984
  %1350 = vst.msk [vmem:[%s2] sm:$0x3] %vm1349, %v1348
  // Predicated region
  $region10: #{forward.1} parent=0 // pred_check
    _
  $region11: #{forward.1} parent=0 // pred_check_branch
    %1352 = sbr.rel (0) target = $region13
  $region12: #{forward.1} parent=0 // pred_region
    _
  $region13: #{forward.1} parent=0 // pred_fallthru
    _
  // Predicated region
  $region14: #{forward.1} parent=0 // pred_check
    _
  $region15: #{forward.1} parent=0 // pred_check_branch
    %1354 = sbr.rel (0) target = $region17
  $region16: #{forward.1} parent=0 // pred_region
    _
  $region17: #{forward.1} parent=0 // pred_fallthru
    _

</llo_original>
